<compile_context>
chip_gen: v6e
topology: v6e:2x2x1
jax: 0.10.0
libtpu: 0.0.40
codegen_flags: <defaults>
</compile_context>

<pallas_src>
import functools

import jax
import jax.numpy as jnp
from jax.experimental import pallas as pl
from jax.experimental.pallas import tpu as pltpu


# ----------------------------------------------------------------------------
# Kernel 1: GraphSAGE (mean aggregator) layer, tiled over rows and contraction.
#   neigh_tile = sum_k A_norm[i, k] @ X[k]              (accumulated in VMEM)
#   h_tile     = relu(concat([X[i], neigh_tile]) @ [W_self; W_neigh] + b)
# ----------------------------------------------------------------------------
def sage_layer_kernel(a_ref, xk_ref, xs_ref, w_ref, b_ref, h_ref, acc_ref):
    k = pl.program_id(1)

    @pl.when(k == 0)
    def _():
        acc_ref[...] = jnp.zeros_like(acc_ref)

    # Accumulate the neighbour aggregation A_norm @ X for this row tile.
    acc_ref[...] += jnp.dot(a_ref[...], xk_ref[...],
                            preferred_element_type=jnp.float32)

    @pl.when(k == pl.num_programs(1) - 1)
    def _():
        # Fused projection: one (tm, 2*Din) @ (2*Din, D) matmul.
        xz = jnp.concatenate([xs_ref[...], acc_ref[...]], axis=1)
        h = jnp.dot(xz, w_ref[...], preferred_element_type=jnp.float32)
        h = h + b_ref[...]
        h_ref[...] = jnp.maximum(h, 0.0)


def sage_layer(x, a_norm, w_stacked, b, *, tm, tk):
    n, din = x.shape
    d = w_stacked.shape[1]
    assert a_norm.shape == (n, n)
    assert w_stacked.shape[0] == 2 * din
    assert n % tm == 0 and n % tk == 0

    flops = 2 * n * n * din + 2 * n * (2 * din) * d
    bytes_accessed = 4 * (n * n + 2 * n * din + 2 * din * d + d + n * d)

    return pl.pallas_call(
        sage_layer_kernel,
        out_shape=jax.ShapeDtypeStruct((n, d), jnp.float32),
        grid_spec=pltpu.PrefetchScalarGridSpec(
            num_scalar_prefetch=0,
            grid=(n // tm, n // tk),
            in_specs=[
                pl.BlockSpec((tm, tk), lambda i, k: (i, k)),       # A_norm tile
                pl.BlockSpec((tk, din), lambda i, k: (k, 0)),      # X (contraction)
                pl.BlockSpec((tm, din), lambda i, k: (i, 0)),      # X (self rows)
                pl.BlockSpec((2 * din, d), lambda i, k: (0, 0)),   # [W_self; W_neigh]
                pl.BlockSpec((1, d), lambda i, k: (0, 0)),         # bias
            ],
            out_specs=pl.BlockSpec((tm, d), lambda i, k: (i, 0)),
            scratch_shapes=[pltpu.VMEM((tm, din), jnp.float32)],
        ),
        compiler_params=pltpu.CompilerParams(
            dimension_semantics=("parallel", "arbitrary")),
        cost_estimate=pl.CostEstimate(flops=flops, transcendentals=0,
                                      bytes_accessed=bytes_accessed),
    )(a_norm, x, x, w_stacked, b)


# ----------------------------------------------------------------------------
# Kernel 2: edge scoring with bias folded into the gather.
#   h_aug^T has shape (D+1, N): rows 0..D-1 = h^T, row D = node_biases[1:].
#   For each (edge tile, node tile):
#     one-hot  (tn, 2*te)  = (node_id == [src_tile | dst_tile])
#     acc     (D+1, 2*te) += h_aug^T[:, node tile] @ one-hot      (MXU)
#   Finalize: score = sum_d gs[d]*gd[d]  +  gs[bias_row] + gd[bias_row]
#   written as a lane-dense (1, te) row.
# ----------------------------------------------------------------------------
def score_kernel(src_ref, dst_ref, haugt_ref, out_ref, acc_ref):
    nj = pl.program_id(1)
    daug, tn = haugt_ref.shape
    te = src_ref.shape[1]

    @pl.when(nj == 0)
    def _():
        acc_ref[...] = jnp.zeros_like(acc_ref)

    node_base = nj * tn
    sd = jnp.concatenate([src_ref[...], dst_ref[...]], axis=1)        # (1, 2*te)
    niota = jax.lax.broadcasted_iota(jnp.int32, (tn, 2 * te), 0) + node_base
    onehot = (niota == sd).astype(jnp.float32)                        # (tn, 2*te)

    # Gather embeddings + bias for src and dst in a single matmul.
    acc_ref[...] += jnp.dot(haugt_ref[...], onehot,
                            preferred_element_type=jnp.float32)       # (daug, 2*te)

    @pl.when(nj == pl.num_programs(1) - 1)
    def _():
        acc = acc_ref[...]
        gs = acc[:, :te]                                              # (daug, te)
        gd = acc[:, te:]                                              # (daug, te)
        riota = jax.lax.broadcasted_iota(jnp.int32, (daug, 1), 0)
        is_bias = (riota == (daug - 1)).astype(jnp.float32)           # bias row
        is_feat = 1.0 - is_bias
        combined = gs * gd * is_feat + (gs + gd) * is_bias
        out_ref[...] = jnp.sum(combined, axis=0, keepdims=True)       # (1, te)


def edge_scores(h_aug_t, src_row, dst_row, *, te, tn):
    daug, n = h_aug_t.shape
    e = src_row.shape[1]
    assert e % te == 0 and n % tn == 0

    flops = 2 * (2 * e) * n * daug + 6 * e * daug
    bytes_accessed = 4 * (daug * n + 3 * e)

    out = pl.pallas_call(
        score_kernel,
        out_shape=jax.ShapeDtypeStruct((1, e), jnp.float32),
        grid_spec=pltpu.PrefetchScalarGridSpec(
            num_scalar_prefetch=0,
            grid=(e // te, n // tn),
            in_specs=[
                pl.BlockSpec((1, te), lambda ei, nj: (0, ei)),        # src row
                pl.BlockSpec((1, te), lambda ei, nj: (0, ei)),        # dst row
                pl.BlockSpec((daug, tn), lambda ei, nj: (0, nj)),     # h_aug^T tile
            ],
            out_specs=pl.BlockSpec((1, te), lambda ei, nj: (0, ei)),
            scratch_shapes=[pltpu.VMEM((daug, 2 * te), jnp.float32)],
        ),
        compiler_params=pltpu.CompilerParams(
            dimension_semantics=("parallel", "arbitrary")),
        cost_estimate=pl.CostEstimate(flops=flops, transcendentals=0,
                                      bytes_accessed=bytes_accessed),
    )(src_row, dst_row, h_aug_t)
    return out.reshape(e)


# ----------------------------------------------------------------------------
# GraphSAGERecommender forward (wrapper = glue; kernels do the heavy compute).
# ----------------------------------------------------------------------------
@functools.partial(jax.jit, static_argnames=("tm", "tk", "tn", "te"))
def graphsage_recommender_forward(params, x, a_norm, src, dst,
                                  *, tm=128, tk=128, tn=128, te=128):
    # Stack projection weights once (enables the fused K=2*Din matmul).
    w_stacked = jnp.concatenate([params["w_self"], params["w_neigh"]], axis=0)
    h = sage_layer(x, a_norm, w_stacked, params["sage_bias"], tm=tm, tk=tk)

    # Fold per-node biases into the embedding table as an extra row of h^T.
    n = x.shape[0]
    bias_row = params["node_biases"][1:].reshape(1, n).astype(jnp.float32)
    h_aug_t = jnp.concatenate([h.T, bias_row], axis=0)                # (D+1, N)

    src_row = src.astype(jnp.int32).reshape(1, -1)
    dst_row = dst.astype(jnp.int32).reshape(1, -1)
    return edge_scores(h_aug_t, src_row, dst_row, te=te, tn=tn)


def reference_forward(params, x, a_norm, src, dst):
    hp = jax.lax.Precision.HIGHEST
    neigh = jnp.dot(a_norm, x, precision=hp)
    h = jnp.maximum(
        jnp.dot(x, params["w_self"], precision=hp)
        + jnp.dot(neigh, params["w_neigh"], precision=hp)
        + params["sage_bias"], 0.0)
    nb = params["node_biases"]
    return (h[src] * h[dst]).sum(1) + nb[src + 1] + nb[dst + 1]


if __name__ == "__main__":
    N = 256     # number of graph nodes
    DIN = 128   # input feature dim
    D = 128     # hidden / output feature dim
    E = 256     # number of (src, dst) pairs to score

    key = jax.random.PRNGKey(0)
    k_x, k_a, k_ws, k_wn, k_b, k_nb, k_src, k_dst = jax.random.split(key, 8)

    x = jax.random.normal(k_x, (N, DIN), dtype=jnp.float32)

    # Deterministic random adjacency, row-normalised (mean aggregator).
    adj = (jax.random.uniform(k_a, (N, N)) < 0.1).astype(jnp.float32)
    deg = jnp.maximum(adj.sum(axis=1, keepdims=True), 1.0)
    a_norm = adj / deg

    params = {
        "w_self": jax.random.normal(k_ws, (DIN, D), dtype=jnp.float32) * 0.1,
        "w_neigh": jax.random.normal(k_wn, (DIN, D), dtype=jnp.float32) * 0.1,
        "sage_bias": jax.random.normal(k_b, (1, D), dtype=jnp.float32) * 0.01,
        # nn.Parameter over N+1 node biases (random here so the bias path is
        # actually exercised by the check; the PyTorch init is zeros).
        "node_biases": jax.random.normal(k_nb, (N + 1,), dtype=jnp.float32) * 0.1,
    }

    src = jax.random.randint(k_src, (E,), 0, N, dtype=jnp.int32)
    dst = jax.random.randint(k_dst, (E,), 0, N, dtype=jnp.int32)

    score = graphsage_recommender_forward(params, x, a_norm, src, dst)
    score = jax.block_until_ready(score)

    ref = reference_forward(params, x, a_norm, src, dst)
    assert score.shape == (E,)
    assert jnp.allclose(score, ref, atol=2e-3, rtol=2e-3), (score, ref)
    print("KERNEL_OK")
</pallas_src>

<mosaic_0001>
module attributes {stable_mosaic.version = 11 : i64} {
  func.func @sage_layer_kernel(%arg0: i32, %arg1: i32, %arg2: memref<128x128xf32, #tpu.memory_space<vmem>>, %arg3: memref<128x128xf32, #tpu.memory_space<vmem>>, %arg4: memref<128x128xf32, #tpu.memory_space<vmem>>, %arg5: memref<256x128xf32, #tpu.memory_space<vmem>>, %arg6: memref<1x128xf32, #tpu.memory_space<vmem>>, %arg7: memref<128x128xf32, #tpu.memory_space<vmem>>, %arg8: memref<128x128xf32, #tpu.memory_space<vmem>>) attributes {dimension_semantics = [#tpu.dimension_semantics<parallel>, #tpu.dimension_semantics<arbitrary>], iteration_bounds = array<i64: 2, 2>, scalar_prefetch = 0 : i64, scratch_operands = 1 : i64, tpu.core_type = #tpu.core_type<tc>, window_params = [{transform_indices = @transform_0, window_bounds = array<i64: 128, 128>}, {transform_indices = @transform_1, window_bounds = array<i64: 128, 128>}, {transform_indices = @transform_2, window_bounds = array<i64: 128, 128>}, {pipeline_mode = #tpu.pipeline_mode<synchronous>, transform_indices = @transform_3, window_bounds = array<i64: 256, 128>}, {pipeline_mode = #tpu.pipeline_mode<synchronous>, transform_indices = @transform_4, window_bounds = array<i64: 1, 128>}, {transform_indices = @transform_5, window_bounds = array<i64: 128, 128>}]} {
    %c0_i32 = arith.constant 0 : i32
    %0 = arith.cmpi eq, %arg1, %c0_i32 : i32
    %1 = arith.extui %0 : i1 to i32
    %c0_i32_0 = arith.constant 0 : i32
    %2 = arith.cmpi ne, %1, %c0_i32_0 : i32
    scf.if %2 {
      %cst_9 = arith.constant 0.000000e+00 : f32
      %12 = vector.broadcast %cst_9 : f32 to vector<128x128xf32>
      %c0_10 = arith.constant 0 : index
      %c0_11 = arith.constant 0 : index
      %13 = vector.load %arg8[%c0_10, %c0_11] : memref<128x128xf32, #tpu.memory_space<vmem>>, vector<128x128xf32>
      tpu.vector_store %arg8[%c0_10, %c0_11], %12 {strides = array<i32>} : memref<128x128xf32, #tpu.memory_space<vmem>>, vector<128x128xf32>,
    } else {
    }
    %c0 = arith.constant 0 : index
    %c0_1 = arith.constant 0 : index
    %3 = vector.load %arg8[%c0, %c0_1] : memref<128x128xf32, #tpu.memory_space<vmem>>, vector<128x128xf32>
    %c0_2 = arith.constant 0 : index
    %c0_3 = arith.constant 0 : index
    %4 = vector.load %arg2[%c0_2, %c0_3] : memref<128x128xf32, #tpu.memory_space<vmem>>, vector<128x128xf32>
    %c0_4 = arith.constant 0 : index
    %c0_5 = arith.constant 0 : index
    %5 = vector.load %arg3[%c0_4, %c0_5] : memref<128x128xf32, #tpu.memory_space<vmem>>, vector<128x128xf32>
    %cst = arith.constant dense<0.000000e+00> : vector<128x128xf32>
    %6 = tpu.matmul %4, %5, %cst {dimension_numbers = #tpu.dot_dimension_numbers<[1], [0], [0], [1], [0, 0, 1, 1], [], []>} : vector<128x128xf32>, vector<128x128xf32>, vector<128x128xf32> -> vector<128x128xf32>
    %7 = arith.addf %3, %6 : vector<128x128xf32>
    %c0_6 = arith.constant 0 : index
    %c0_7 = arith.constant 0 : index
    %8 = vector.load %arg8[%c0_6, %c0_7] : memref<128x128xf32, #tpu.memory_space<vmem>>, vector<128x128xf32>
    tpu.vector_store %arg8[%c0_6, %c0_7], %7 {strides = array<i32>} : memref<128x128xf32, #tpu.memory_space<vmem>>, vector<128x128xf32>,
    %c1_i32 = arith.constant 1 : i32
    %9 = arith.cmpi eq, %arg1, %c1_i32 : i32
    %10 = arith.extui %9 : i1 to i32
    %c0_i32_8 = arith.constant 0 : i32
    %11 = arith.cmpi ne, %10, %c0_i32_8 : i32
    scf.if %11 {
      %c0_9 = arith.constant 0 : index
      %c0_10 = arith.constant 0 : index
      %12 = vector.load %arg4[%c0_9, %c0_10] : memref<128x128xf32, #tpu.memory_space<vmem>>, vector<128x128xf32>
      %c0_11 = arith.constant 0 : index
      %c0_12 = arith.constant 0 : index
      %13 = vector.load %arg8[%c0_11, %c0_12] : memref<128x128xf32, #tpu.memory_space<vmem>>, vector<128x128xf32>
      %14 = tpu.concatenate %12, %13 in 1 : vector<128x128xf32>, vector<128x128xf32> -> vector<128x256xf32>
      %c0_13 = arith.constant 0 : index
      %c0_14 = arith.constant 0 : index
      %15 = vector.load %arg5[%c0_13, %c0_14] : memref<256x128xf32, #tpu.memory_space<vmem>>, vector<256x128xf32>
      %cst_15 = arith.constant dense<0.000000e+00> : vector<128x128xf32>
      %16 = tpu.matmul %14, %15, %cst_15 {dimension_numbers = #tpu.dot_dimension_numbers<[1], [0], [0], [1], [0, 0, 1, 1], [], []>} : vector<128x256xf32>, vector<256x128xf32>, vector<128x128xf32> -> vector<128x128xf32>
      %c0_16 = arith.constant 0 : index
      %c0_17 = arith.constant 0 : index
      %17 = vector.load %arg6[%c0_16, %c0_17] : memref<1x128xf32, #tpu.memory_space<vmem>>, vector<1x128xf32>
      %18 = vector.broadcast %17 : vector<1x128xf32> to vector<128x128xf32>
      %19 = arith.addf %16, %18 : vector<128x128xf32>
      %cst_18 = arith.constant 0.000000e+00 : f32
      %20 = vector.broadcast %cst_18 : f32 to vector<128x128xf32>
      %21 = arith.maximumf %19, %20 : vector<128x128xf32>
      %c0_19 = arith.constant 0 : index
      %c0_20 = arith.constant 0 : index
      %22 = vector.load %arg7[%c0_19, %c0_20] : memref<128x128xf32, #tpu.memory_space<vmem>>, vector<128x128xf32>
      tpu.vector_store %arg7[%c0_19, %c0_20], %21 {strides = array<i32>} : memref<128x128xf32, #tpu.memory_space<vmem>>, vector<128x128xf32>,
    } else {
    }
    return
  }
  func.func @transform_0(%arg0: i32, %arg1: i32) -> (i32, i32) {
    %c0_i32 = arith.constant 0 : i32
    return %arg0, %arg1 : i32, i32
  }
  func.func @transform_1(%arg0: i32, %arg1: i32) -> (i32, i32) {
    %c0_i32 = arith.constant 0 : i32
    %c0_i32_0 = arith.constant 0 : i32
    return %arg1, %c0_i32 : i32, i32
  }
  func.func @transform_2(%arg0: i32, %arg1: i32) -> (i32, i32) {
    %c0_i32 = arith.constant 0 : i32
    %c0_i32_0 = arith.constant 0 : i32
    return %arg0, %c0_i32 : i32, i32
  }
  func.func @transform_3(%arg0: i32, %arg1: i32) -> (i32, i32) {
    %c0_i32 = arith.constant 0 : i32
    %c0_i32_0 = arith.constant 0 : i32
    %c0_i32_1 = arith.constant 0 : i32
    return %c0_i32, %c0_i32_0 : i32, i32
  }
  func.func @transform_4(%arg0: i32, %arg1: i32) -> (i32, i32) {
    %c0_i32 = arith.constant 0 : i32
    %c0_i32_0 = arith.constant 0 : i32
    %c0_i32_1 = arith.constant 0 : i32
    return %c0_i32, %c0_i32_0 : i32, i32
  }
  func.func @transform_5(%arg0: i32, %arg1: i32) -> (i32, i32) {
    %c0_i32 = arith.constant 0 : i32
    %c0_i32_0 = arith.constant 0 : i32
    return %arg0, %c0_i32 : i32, i32
  }
}

module attributes {stable_mosaic.version = 11 : i64} {
  func.func @score_kernel(%arg0: i32, %arg1: i32, %arg2: memref<1x128xi32, #tpu.memory_space<vmem>>, %arg3: memref<1x128xi32, #tpu.memory_space<vmem>>, %arg4: memref<129x128xf32, #tpu.memory_space<vmem>>, %arg5: memref<1x128xf32, #tpu.memory_space<vmem>>, %arg6: memref<129x256xf32, #tpu.memory_space<vmem>>) attributes {dimension_semantics = [#tpu.dimension_semantics<parallel>, #tpu.dimension_semantics<arbitrary>], iteration_bounds = array<i64: 2, 2>, scalar_prefetch = 0 : i64, scratch_operands = 1 : i64, tpu.core_type = #tpu.core_type<tc>, window_params = [{transform_indices = @transform_0, window_bounds = array<i64: 1, 128>}, {transform_indices = @transform_1, window_bounds = array<i64: 1, 128>}, {transform_indices = @transform_2, window_bounds = array<i64: 129, 128>}, {transform_indices = @transform_3, window_bounds = array<i64: 1, 128>}]} {
    %c0_i32 = arith.constant 0 : i32
    %0 = arith.cmpi eq, %arg1, %c0_i32 : i32
    %1 = arith.extui %0 : i1 to i32
    %c0_i32_0 = arith.constant 0 : i32
    %2 = arith.cmpi ne, %1, %c0_i32_0 : i32
    scf.if %2 {
      %cst_11 = arith.constant 0.000000e+00 : f32
      %22 = vector.broadcast %cst_11 : f32 to vector<129x256xf32>
      %c0_12 = arith.constant 0 : index
      %c0_13 = arith.constant 0 : index
      %23 = vector.load %arg6[%c0_12, %c0_13] : memref<129x256xf32, #tpu.memory_space<vmem>>, vector<129x256xf32>
      tpu.vector_store %arg6[%c0_12, %c0_13], %22 {strides = array<i32>} : memref<129x256xf32, #tpu.memory_space<vmem>>, vector<129x256xf32>,
    } else {
    }
    %c128_i32 = arith.constant 128 : i32
    %3 = arith.muli %arg1, %c128_i32 : i32
    %c0 = arith.constant 0 : index
    %c0_1 = arith.constant 0 : index
    %4 = vector.load %arg2[%c0, %c0_1] : memref<1x128xi32, #tpu.memory_space<vmem>>, vector<1x128xi32>
    %c0_2 = arith.constant 0 : index
    %c0_3 = arith.constant 0 : index
    %5 = vector.load %arg3[%c0_2, %c0_3] : memref<1x128xi32, #tpu.memory_space<vmem>>, vector<1x128xi32>
    %6 = tpu.concatenate %4, %5 in 1 : vector<1x128xi32>, vector<1x128xi32> -> vector<1x256xi32>
    %7 = tpu.iota {dimensions = array<i32: 0>} : vector<128x256xi32>
    %8 = vector.broadcast %3 : i32 to vector<128x256xi32>
    %9 = arith.addi %7, %8 : vector<128x256xi32>
    %10 = vector.broadcast %6 : vector<1x256xi32> to vector<128x256xi32>
    %11 = arith.cmpi eq, %9, %10 : vector<128x256xi32>
    %12 = arith.extui %11 : vector<128x256xi1> to vector<128x256xi32>
    %13 = arith.sitofp %12 : vector<128x256xi32> to vector<128x256xf32>
    %c0_4 = arith.constant 0 : index
    %c0_5 = arith.constant 0 : index
    %14 = vector.load %arg6[%c0_4, %c0_5] : memref<129x256xf32, #tpu.memory_space<vmem>>, vector<129x256xf32>
    %c0_6 = arith.constant 0 : index
    %c0_7 = arith.constant 0 : index
    %15 = vector.load %arg4[%c0_6, %c0_7] : memref<129x128xf32, #tpu.memory_space<vmem>>, vector<129x128xf32>
    %cst = arith.constant dense<0.000000e+00> : vector<129x256xf32>
    %16 = tpu.matmul %15, %13, %cst {dimension_numbers = #tpu.dot_dimension_numbers<[1], [0], [0], [1], [0, 0, 1, 1], [], []>} : vector<129x128xf32>, vector<128x256xf32>, vector<129x256xf32> -> vector<129x256xf32>
    %17 = arith.addf %14, %16 : vector<129x256xf32>
    %c0_8 = arith.constant 0 : index
    %c0_9 = arith.constant 0 : index
    %18 = vector.load %arg6[%c0_8, %c0_9] : memref<129x256xf32, #tpu.memory_space<vmem>>, vector<129x256xf32>
    tpu.vector_store %arg6[%c0_8, %c0_9], %17 {strides = array<i32>} : memref<129x256xf32, #tpu.memory_space<vmem>>, vector<129x256xf32>,
    %c1_i32 = arith.constant 1 : i32
    %19 = arith.cmpi eq, %arg1, %c1_i32 : i32
    %20 = arith.extui %19 : i1 to i32
    %c0_i32_10 = arith.constant 0 : i32
    %21 = arith.cmpi ne, %20, %c0_i32_10 : i32
    scf.if %21 {
      %c0_11 = arith.constant 0 : index
      %c0_12 = arith.constant 0 : index
      %22 = vector.load %arg6[%c0_11, %c0_12] : memref<129x256xf32, #tpu.memory_space<vmem>>, vector<129x256xf32>
      %23 = vector.extract_strided_slice %22 {offsets = [0, 0], sizes = [129, 128], strides = [1, 1]} : vector<129x256xf32> to vector<129x128xf32>
      %24 = vector.extract_strided_slice %22 {offsets = [0, 128], sizes = [129, 128], strides = [1, 1]} : vector<129x256xf32> to vector<129x128xf32>
      %25 = tpu.iota {dimensions = array<i32: 0>} : vector<129x1xi32>
      %c128_i32_13 = arith.constant 128 : i32
      %26 = vector.broadcast %c128_i32_13 : i32 to vector<129x1xi32>
      %27 = arith.cmpi eq, %25, %26 : vector<129x1xi32>
      %28 = arith.extui %27 : vector<129x1xi1> to vector<129x1xi32>
      %29 = arith.sitofp %28 : vector<129x1xi32> to vector<129x1xf32>
      %cst_14 = arith.constant 1.000000e+00 : f32
      %30 = vector.broadcast %cst_14 : f32 to vector<129x1xf32>
      %31 = arith.subf %30, %29 : vector<129x1xf32>
      %32 = arith.mulf %23, %24 : vector<129x128xf32>
      %33 = vector.broadcast %31 : vector<129x1xf32> to vector<129x128xf32>
      %34 = arith.mulf %32, %33 : vector<129x128xf32>
      %35 = arith.addf %23, %24 : vector<129x128xf32>
      %36 = vector.broadcast %29 : vector<129x1xf32> to vector<129x128xf32>
      %37 = arith.mulf %35, %36 : vector<129x128xf32>
      %38 = arith.addf %34, %37 : vector<129x128xf32>
      %cst_15 = arith.constant dense<0.000000e+00> : vector<128xf32>
      %39 = vector.multi_reduction <add>, %38, %cst_15 [0] : vector<129x128xf32> to vector<128xf32>
      %40 = vector.shape_cast %39 : vector<128xf32> to vector<1x128xf32>
      %c0_16 = arith.constant 0 : index
      %c0_17 = arith.constant 0 : index
      %41 = vector.load %arg5[%c0_16, %c0_17] : memref<1x128xf32, #tpu.memory_space<vmem>>, vector<1x128xf32>
      tpu.vector_store %arg5[%c0_16, %c0_17], %40 {strides = array<i32>} : memref<1x128xf32, #tpu.memory_space<vmem>>, vector<1x128xf32>,
    } else {
    }
    return
  }
  func.func @transform_0(%arg0: i32, %arg1: i32) -> (i32, i32) {
    %c0_i32 = arith.constant 0 : i32
    %c0_i32_0 = arith.constant 0 : i32
    return %c0_i32, %arg0 : i32, i32
  }
  func.func @transform_1(%arg0: i32, %arg1: i32) -> (i32, i32) {
    %c0_i32 = arith.constant 0 : i32
    %c0_i32_0 = arith.constant 0 : i32
    return %c0_i32, %arg0 : i32, i32
  }
  func.func @transform_2(%arg0: i32, %arg1: i32) -> (i32, i32) {
    %c0_i32 = arith.constant 0 : i32
    %c0_i32_0 = arith.constant 0 : i32
    return %c0_i32, %arg1 : i32, i32
  }
  func.func @transform_3(%arg0: i32, %arg1: i32) -> (i32, i32) {
    %c0_i32 = arith.constant 0 : i32
    %c0_i32_0 = arith.constant 0 : i32
    return %c0_i32, %arg0 : i32, i32
  }
}

</mosaic_0001>

<llo_original>
// kernel: graphsage_recommender_forward.2
$region0: #{graphsage_recommender_forward.2}
  #allocation0 [shape = 'u32[]', space=smem, size = 0x4, offset = 0x4, fixed_abs, tag = 'smem constant byte address 0x4 - core index']
  #allocation1 [shape = 'u32[144,128]{1,0:T(1,128)}', space=vmem, size = 0x12000, scoped, tag = 'internal scratch']
  #allocation2 [shape = 'f32[128,128]{1,0:T(8,128)}', space=vmem, size = 0x10000, scoped, tag = 'scratch operand']
  %s0 = inlined_call_operand.hbm [shape: f32[256,256], index: 0, kind: input, shape index: {}]
  %s1 = inlined_call_operand.vmem [shape: f32[256,128], index: 1, kind: input, shape index: {}, may-alias: {1,2}]
  %s2 = inlined_call_operand.vmem [shape: f32[256,128], index: 2, kind: input, shape index: {}, may-alias: {1,2}]
  %s3 = inlined_call_operand.vmem [shape: f32[256,128], index: 3, kind: input, shape index: {}]
  %s4 = inlined_call_operand.vmem [shape: f32[1,128], index: 4, kind: input, shape index: {}]
  %s5 = inlined_call_operand.vmem [shape: f32[256,128], index: 5, kind: output, shape index: {}]
  %s6 = sld [smem:[#allocation0]]
  $region65: #{graphsage_recommender_forward.2} parent=0
    _
  %s8 = ssub.s32 1, %s6
  %s9 = scalar_select 0, %s8, %s6
  $region1: #{graphsage_recommender_forward.2} parent=0
    #allocation3 [shape = 'u8[131072]{0}', space=vmem, size = 0x20000, scoped, tag = 'input window, operand 0']
    #allocation4 [shape = 's32[2]{0}', space=sflag, size = 0x8, scoped, tag = 'scoped memory for graphsage_recommender_forward.2']
    %10 = vsyncpa [#allocation4], 0
    %s11 = scalar_lea.sflag [#allocation4], 1
    %12 = vsyncpa %s11, 0
    loop: start=0, step=1, limit=6
    $region2: #{graphsage_recommender_forward.2} parent=1 // loop_pre_header
      _
    $region3: #{graphsage_recommender_forward.2} parent=1 // loop_header
      %s14 = sphi 0, %s18
      %p15 = scmp.ge.s32.totalorder %s14, 6
      %s21 = sphi 0, %s33
      %s22 = sphi 0, %s29
      %s23 = sphi 0, %s21
      %s24 = sphi 0, %s22
      %s25 = sphi 0, %s23
      %s26 = sphi 0, %s24
      %s38 = sphi 0, %s40
      %s41 = sphi 0, %s38
      %s42 = sphi 0, %s41
      %s58 = sphi 0, %s42
      %s64 = sphi 0, %s66
      %s67 = sphi 0, %s64
      %s68 = sphi 0, %s67
      %s84 = sphi 0, %s68
      %s90 = sphi 0, %s92
      %s93 = sphi 0, %s90
      %s94 = sphi 0, %s93
      %s110 = sphi 0, %s94
      %s114 = sphi 0, %s114
      %s116 = sphi 0, %s114
      %s117 = sphi 0, %s116
      %s131 = sphi 0, %s117
      %s135 = sphi 0, %s135
      %s137 = sphi 0, %s135
      %s138 = sphi 0, %s137
      %s152 = sphi 0, %s138
      %s158 = sphi 0, %s160
      %s161 = sphi 0, %s158
      %s162 = sphi 0, %s161
      %s178 = sphi 0, %s162
    $region4: #{graphsage_recommender_forward.2} parent=1 // loop_header_branch
      %17 = sbr.rel (%p15) target = $region8
    $region5: #{graphsage_recommender_forward.2} parent=1 // loop_body
      %s19 = ssub.s32 %s14, 1
      %s20 = ssub.s32 %s14, 2
      %s27 = sadd.s32 1, %s22
      %p28 = scmp.ge.s32.totalorder %s27, 2
      %s29 = scalar_select %p28, 0, %s27
      %s30 = sadd.s32 1, %s21
      %s31 = scalar_select %p28, %s30, %s21
      %p32 = scmp.ge.s32.totalorder %s31, 2
      %s33 = scalar_select %p32, 0, %s31
      %s34 = ssub.s32 %s21, %s33
      %s35 = ssub.s32 %s22, %s29
      %s36 = sor.u32 %s34, %s35
      %p37 = scmp.eq.s32.totalorder %s36, 0
      %s39 = sadd.s32 %s38, 1
      %s40 = scalar_select %p37, %s38, %s39
      %p43 = pneg %p37
      %p44 = scmp.eq.s32.totalorder %s14, 3
      %p45 = por %p43, %p44
      %p46 = scmp.ne.s32.totalorder %s38, %s41
      %p47 = scmp.eq.s32.totalorder %s14, 0
      %p48 = por %p46, %p47
      %p49 = scmp.ne.s32.totalorder %s38, %s41
      %p50 = scmp.eq.s32.totalorder %s19, 3
      %p51 = por %p49, %p50
      %p52 = scmp.ne.s32.totalorder %s41, %s42
      %p53 = scmp.eq.s32.totalorder %s19, 0
      %p54 = por %p52, %p53
      %p55 = scmp.ne.s32.totalorder %s41, %s42
      %p56 = scmp.eq.s32.totalorder %s20, 3
      %p57 = por %p55, %p56
      %p59 = scmp.ne.s32.totalorder %s42, %s58
      %p60 = scmp.eq.s32.totalorder %s20, 0
      %p61 = por %p59, %p60
      %s62 = ssub.s32 %s22, %s29
      %p63 = scmp.eq.s32.totalorder %s62, 0
      %s65 = sadd.s32 %s64, 1
      %s66 = scalar_select %p63, %s64, %s65
      %p69 = pneg %p63
      %p70 = scmp.eq.s32.totalorder %s14, 3
      %p71 = por %p69, %p70
      %p72 = scmp.ne.s32.totalorder %s64, %s67
      %p73 = scmp.eq.s32.totalorder %s14, 0
      %p74 = por %p72, %p73
      %p75 = scmp.ne.s32.totalorder %s64, %s67
      %p76 = scmp.eq.s32.totalorder %s19, 3
      %p77 = por %p75, %p76
      %p78 = scmp.ne.s32.totalorder %s67, %s68
      %p79 = scmp.eq.s32.totalorder %s19, 0
      %p80 = por %p78, %p79
      %p81 = scmp.ne.s32.totalorder %s67, %s68
      %p82 = scmp.eq.s32.totalorder %s20, 3
      %p83 = por %p81, %p82
      %p85 = scmp.ne.s32.totalorder %s68, %s84
      %p86 = scmp.eq.s32.totalorder %s20, 0
      %p87 = por %p85, %p86
      %s88 = ssub.s32 %s21, %s33
      %p89 = scmp.eq.s32.totalorder %s88, 0
      %s91 = sadd.s32 %s90, 1
      %s92 = scalar_select %p89, %s90, %s91
      %p95 = pneg %p89
      %p96 = scmp.eq.s32.totalorder %s14, 3
      %p97 = por %p95, %p96
      %p98 = scmp.ne.s32.totalorder %s90, %s93
      %p99 = scmp.eq.s32.totalorder %s14, 0
      %p100 = por %p98, %p99
      %p101 = scmp.ne.s32.totalorder %s90, %s93
      %p102 = scmp.eq.s32.totalorder %s19, 3
      %p103 = por %p101, %p102
      %p104 = scmp.ne.s32.totalorder %s93, %s94
      %p105 = scmp.eq.s32.totalorder %s19, 0
      %p106 = por %p104, %p105
      %p107 = scmp.ne.s32.totalorder %s93, %s94
      %p108 = scmp.eq.s32.totalorder %s20, 3
      %p109 = por %p107, %p108
      %p111 = scmp.ne.s32.totalorder %s94, %s110
      %p112 = scmp.eq.s32.totalorder %s20, 0
      %p113 = por %p111, %p112
      %s115 = sadd.s32 %s114, 1
      %p118 = scmp.eq.s32.totalorder %s14, 3
      %p119 = scmp.ne.s32.totalorder %s114, %s116
      %p120 = scmp.eq.s32.totalorder %s14, 0
      %p121 = por %p119, %p120
      %p122 = scmp.ne.s32.totalorder %s114, %s116
      %p123 = scmp.eq.s32.totalorder %s19, 3
      %p124 = por %p122, %p123
      %p125 = scmp.ne.s32.totalorder %s116, %s117
      %p126 = scmp.eq.s32.totalorder %s19, 0
      %p127 = por %p125, %p126
      %p128 = scmp.ne.s32.totalorder %s116, %s117
      %p129 = scmp.eq.s32.totalorder %s20, 3
      %p130 = por %p128, %p129
      %p132 = scmp.ne.s32.totalorder %s117, %s131
      %p133 = scmp.eq.s32.totalorder %s20, 0
      %p134 = por %p132, %p133
      %s136 = sadd.s32 %s135, 1
      %p139 = scmp.eq.s32.totalorder %s14, 3
      %p140 = scmp.ne.s32.totalorder %s135, %s137
      %p141 = scmp.eq.s32.totalorder %s14, 0
      %p142 = por %p140, %p141
      %p143 = scmp.ne.s32.totalorder %s135, %s137
      %p144 = scmp.eq.s32.totalorder %s19, 3
      %p145 = por %p143, %p144
      %p146 = scmp.ne.s32.totalorder %s137, %s138
      %p147 = scmp.eq.s32.totalorder %s19, 0
      %p148 = por %p146, %p147
      %p149 = scmp.ne.s32.totalorder %s137, %s138
      %p150 = scmp.eq.s32.totalorder %s20, 3
      %p151 = por %p149, %p150
      %p153 = scmp.ne.s32.totalorder %s138, %s152
      %p154 = scmp.eq.s32.totalorder %s20, 0
      %p155 = por %p153, %p154
      %s156 = ssub.s32 %s21, %s33
      %p157 = scmp.eq.s32.totalorder %s156, 0
      %s159 = sadd.s32 %s158, 1
      %s160 = scalar_select %p157, %s158, %s159
      %p163 = pneg %p157
      %p164 = scmp.eq.s32.totalorder %s14, 3
      %p165 = por %p163, %p164
      %p166 = scmp.ne.s32.totalorder %s158, %s161
      %p167 = scmp.eq.s32.totalorder %s14, 0
      %p168 = por %p166, %p167
      %p169 = scmp.ne.s32.totalorder %s158, %s161
      %p170 = scmp.eq.s32.totalorder %s19, 3
      %p171 = por %p169, %p170
      %p172 = scmp.ne.s32.totalorder %s161, %s162
      %p173 = scmp.eq.s32.totalorder %s19, 0
      %p174 = por %p172, %p173
      %p175 = scmp.ne.s32.totalorder %s161, %s162
      %p176 = scmp.eq.s32.totalorder %s20, 3
      %p177 = por %p175, %p176
      %p179 = scmp.ne.s32.totalorder %s162, %s178
      %p180 = scmp.eq.s32.totalorder %s20, 0
      %p181 = por %p179, %p180
      %p182 = scmp.le.s32.totalorder 1, %s14
      %p183 = scmp.lt.s32.totalorder %s14, 5
      %p184 = pnand %p182, %p183
      %p185 = pneg %p184
      // Predicated region
      $region9: #{graphsage_recommender_forward.2} parent=5 // pred_check
        _
      $region10: #{graphsage_recommender_forward.2} parent=5 // pred_check_branch
        %187 = sbr.rel (%p184) target = $region12
      $region11: #{graphsage_recommender_forward.2} parent=5 // pred_region
        %s188 = ssub.s32 %s14, 1
        // Predicated region
        $region13: #{graphsage_recommender_forward.2} parent=11 // pred_check
          %p189 = pneg %p127
        $region14: #{graphsage_recommender_forward.2} parent=11 // pred_check_branch
          %191 = sbr.rel (%p189) target = $region16
        $region15: #{graphsage_recommender_forward.2} parent=11 // pred_region
          _
        $region16: #{graphsage_recommender_forward.2} parent=11 // pred_fallthru
          _
        // Predicated region
        $region17: #{graphsage_recommender_forward.2} parent=11 // pred_check
          %p192 = pneg %p148
        $region18: #{graphsage_recommender_forward.2} parent=11 // pred_check_branch
          %194 = sbr.rel (%p192) target = $region20
        $region19: #{graphsage_recommender_forward.2} parent=11 // pred_region
          _
        $region20: #{graphsage_recommender_forward.2} parent=11 // pred_fallthru
          _
      $region12: #{graphsage_recommender_forward.2} parent=5 // pred_fallthru
        _
      %p195 = scmp.lt.s32.totalorder %s14, 4
      // Predicated region
      $region21: #{graphsage_recommender_forward.2} parent=5 // pred_check
        %p196 = pneg %p195
      $region22: #{graphsage_recommender_forward.2} parent=5 // pred_check_branch
        %198 = sbr.rel (%p196) target = $region24
      $region23: #{graphsage_recommender_forward.2} parent=5 // pred_region
        // Predicated region
        $region25: #{graphsage_recommender_forward.2} parent=23 // pred_check
          %p199 = pneg %p48
        $region26: #{graphsage_recommender_forward.2} parent=23 // pred_check_branch
          %201 = sbr.rel (%p199) target = $region28
        $region27: #{graphsage_recommender_forward.2} parent=23 // pred_region
          %s202 = sand.u32 %s38, 1
          %s203 = scalar_lea.sflag [#allocation4], %s202
          %s204 = sand.u32 %s38, 1
          %s205 = smul.addr %s204, 128
          %s206 = scalar_lea.vmem [#allocation3], %s205
          %s207 = smul.u32 16, %s21
          %s209 = ssub.s32 2048, 2048
          %210 = vsyncadd %s203, %s209
          %s211 = smul.addr %s207, 2
          %s212 = sadd.s32 %s22, %s211
          %s213 = smul.addr %s212, 128
          %s214 = scalar_lea.hbm %s0, %s213
          %s215 = sshll.u32 %s206, 4
          %s216 = int_to_ptr.vmem [resolvable:$true] %s215
          %221 = dma.hbm_to_vmem [thread:$0]  %s214, 2048, %s216, %s203, 256, 128, 8
        $region28: #{graphsage_recommender_forward.2} parent=23 // pred_fallthru
          _
        // Predicated region
        $region29: #{graphsage_recommender_forward.2} parent=23 // pred_check
          %p222 = pneg %p74
        $region30: #{graphsage_recommender_forward.2} parent=23 // pred_check_branch
          %224 = sbr.rel (%p222) target = $region32
        $region31: #{graphsage_recommender_forward.2} parent=23 // pred_region
          %s225 = smul.u32 16, %s22
          %p226 = scmp.lt.s32.totalorder %s225, 31
          %s227 = scalar_select %p226, %s225, 31
          %s228 = smul.addr %s227, 8
          %s229 = scalar_lea.vmem %s1, %s228
          %s230 = smul.u32 16, %s22
        $region32: #{graphsage_recommender_forward.2} parent=23 // pred_fallthru
          _
        // Predicated region
        $region33: #{graphsage_recommender_forward.2} parent=23 // pred_check
          %p231 = pneg %p100
        $region34: #{graphsage_recommender_forward.2} parent=23 // pred_check_branch
          %233 = sbr.rel (%p231) target = $region36
        $region35: #{graphsage_recommender_forward.2} parent=23 // pred_region
          %s234 = smul.u32 16, %s21
          %p235 = scmp.lt.s32.totalorder %s234, 31
          %s236 = scalar_select %p235, %s234, 31
          %s237 = smul.addr %s236, 8
          %s238 = scalar_lea.vmem %s2, %s237
          %s239 = smul.u32 16, %s21
        $region36: #{graphsage_recommender_forward.2} parent=23 // pred_fallthru
          _
      $region24: #{graphsage_recommender_forward.2} parent=5 // pred_fallthru
        _
      %p240 = scmp.le.s32.totalorder 1, %s14
      %p241 = scmp.lt.s32.totalorder %s14, 5
      %p242 = pnand %p240, %p241
      %p243 = pneg %p242
      // Predicated region
      $region37: #{graphsage_recommender_forward.2} parent=5 // pred_check
        _
      $region38: #{graphsage_recommender_forward.2} parent=5 // pred_check_branch
        %245 = sbr.rel (%p242) target = $region40
      $region39: #{graphsage_recommender_forward.2} parent=5 // pred_region
        %s246 = ssub.s32 %s14, 1
        %s247 = sand.u32 %s41, 1
        %s248 = scalar_lea.sflag [#allocation4], %s247
        %s249 = sand.u32 %s41, 1
        %s250 = smul.addr %s249, 128
        %s251 = scalar_lea.vmem [#allocation3], %s250
        // Predicated region
        $region41: #{graphsage_recommender_forward.2} parent=39 // pred_check
          %p252 = pneg %p54
        $region42: #{graphsage_recommender_forward.2} parent=39 // pred_check_branch
          %254 = sbr.rel (%p252) target = $region44
        $region43: #{graphsage_recommender_forward.2} parent=39 // pred_region
          %255 = dma.done %s248, 2048
        $region44: #{graphsage_recommender_forward.2} parent=39 // pred_fallthru
          _
        %s256 = sand.u32 %s41, 1
        %s257 = scalar_lea.sflag [#allocation4], %s256
        %s258 = sand.u32 %s41, 1
        %s259 = smul.addr %s258, 128
        %s260 = scalar_lea.vmem [#allocation3], %s259
        %p261 = pneg %p54
        %p262 = pneg %p51
        %s263 = smul.u32 16, %s24
        %p264 = scmp.lt.s32.totalorder %s263, 31
        %s265 = scalar_select %p264, %s263, 31
        %s266 = smul.addr %s265, 8
        %s267 = scalar_lea.vmem %s1, %s266
        %p268 = pneg %p80
        %p269 = pneg %p77
        %s270 = smul.u32 16, %s23
        %p271 = scmp.lt.s32.totalorder %s270, 31
        %s272 = scalar_select %p271, %s270, 31
        %s273 = smul.addr %s272, 8
        %s274 = scalar_lea.vmem %s2, %s273
        %p275 = pneg %p106
        %p276 = pneg %p103
        %p277 = pneg %p127
        %p278 = pneg %p124
        %p279 = pneg %p148
        %p280 = pneg %p145
        %p281 = pneg %p174
        %p282 = pneg %p171
        %s283 = smul.u32 16, %s23
        %p284 = scmp.lt.s32.totalorder %s283, 31
        %s285 = scalar_select %p284, %s283, 31
        %s286 = smul.addr %s285, 8
        %s287 = scalar_lea.vmem %s5, %s286
        %s288 = smul.u32 16, %s23
        %s289 = smul.u32 16, %s24
        %p290 = scmp.lt.s32.totalorder %s289, 31
        %s291 = scalar_select %p290, %s289, 31
        %s292 = smul.addr %s291, 8
        %s293 = scalar_lea.vmem %s1, %s292
        %s294 = smul.u32 16, %s24
        %s295 = smul.u32 16, %s23
        %p296 = scmp.lt.s32.totalorder %s295, 31
        %s297 = scalar_select %p296, %s295, 31
        %s298 = smul.addr %s297, 8
        %s299 = scalar_lea.vmem %s2, %s298
        %s300 = smul.u32 16, %s23
        %s301 = smul.u32 16, %s23
        %p302 = scmp.lt.s32.totalorder %s301, 31
        %s303 = scalar_select %p302, %s301, 31
        %s304 = smul.addr %s303, 8
        %s305 = scalar_lea.vmem %s5, %s304
        %s306 = smul.u32 16, %s23
        %p307 = scmp.eq.s32.totalorder %s24, 0
        // Predicated region
        $region45: #{graphsage_recommender_forward.2} parent=39 // pred_check
          %p308 = pneg %p307
        $region46: #{graphsage_recommender_forward.2} parent=39 // pred_check_branch
          %310 = sbr.rel (%p308) target = $region48
        $region47: #{graphsage_recommender_forward.2} parent=39 // pred_region
          %311 = vst [vmem:[#allocation2] sm:$0xff] 0.0
          %312 = vst [vmem:[#allocation2 + $0x8] sm:$0xff] 0.0
          %313 = vst [vmem:[#allocation2 + $0x10] sm:$0xff] 0.0
          %314 = vst [vmem:[#allocation2 + $0x18] sm:$0xff] 0.0
          %315 = vst [vmem:[#allocation2 + $0x20] sm:$0xff] 0.0
          %316 = vst [vmem:[#allocation2 + $0x28] sm:$0xff] 0.0
          %317 = vst [vmem:[#allocation2 + $0x30] sm:$0xff] 0.0
          %318 = vst [vmem:[#allocation2 + $0x38] sm:$0xff] 0.0
          %319 = vst [vmem:[#allocation2 + $0x40] sm:$0xff] 0.0
          %320 = vst [vmem:[#allocation2 + $0x48] sm:$0xff] 0.0
          %321 = vst [vmem:[#allocation2 + $0x50] sm:$0xff] 0.0
          %322 = vst [vmem:[#allocation2 + $0x58] sm:$0xff] 0.0
          %323 = vst [vmem:[#allocation2 + $0x60] sm:$0xff] 0.0
          %324 = vst [vmem:[#allocation2 + $0x68] sm:$0xff] 0.0
          %325 = vst [vmem:[#allocation2 + $0x70] sm:$0xff] 0.0
          %326 = vst [vmem:[#allocation2 + $0x78] sm:$0xff] 0.0
        $region48: #{graphsage_recommender_forward.2} parent=39 // pred_fallthru
          _
        %v327 = vld [vmem:[#allocation2] sm:$0xff]
        %v328 = vld [vmem:[#allocation2 + $0x8] sm:$0xff]
        %v329 = vld [vmem:[#allocation2 + $0x10] sm:$0xff]
        %v330 = vld [vmem:[#allocation2 + $0x18] sm:$0xff]
        %v331 = vld [vmem:[#allocation2 + $0x20] sm:$0xff]
        %v332 = vld [vmem:[#allocation2 + $0x28] sm:$0xff]
        %v333 = vld [vmem:[#allocation2 + $0x30] sm:$0xff]
        %v334 = vld [vmem:[#allocation2 + $0x38] sm:$0xff]
        %v335 = vld [vmem:[#allocation2 + $0x40] sm:$0xff]
        %v336 = vld [vmem:[#allocation2 + $0x48] sm:$0xff]
        %v337 = vld [vmem:[#allocation2 + $0x50] sm:$0xff]
        %v338 = vld [vmem:[#allocation2 + $0x58] sm:$0xff]
        %v339 = vld [vmem:[#allocation2 + $0x60] sm:$0xff]
        %v340 = vld [vmem:[#allocation2 + $0x68] sm:$0xff]
        %v341 = vld [vmem:[#allocation2 + $0x70] sm:$0xff]
        %v342 = vld [vmem:[#allocation2 + $0x78] sm:$0xff]
        %v343 = vld [vmem:[%s251] sm:$0xff]
        %v344 = vld [vmem:[%s251 + $0x8] sm:$0xff]
        %v345 = vld [vmem:[%s251 + $0x10] sm:$0xff]
        %v346 = vld [vmem:[%s251 + $0x18] sm:$0xff]
        %v347 = vld [vmem:[%s251 + $0x20] sm:$0xff]
        %v348 = vld [vmem:[%s251 + $0x28] sm:$0xff]
        %v349 = vld [vmem:[%s251 + $0x30] sm:$0xff]
        %v350 = vld [vmem:[%s251 + $0x38] sm:$0xff]
        %v351 = vld [vmem:[%s251 + $0x40] sm:$0xff]
        %v352 = vld [vmem:[%s251 + $0x48] sm:$0xff]
        %v353 = vld [vmem:[%s251 + $0x50] sm:$0xff]
        %v354 = vld [vmem:[%s251 + $0x58] sm:$0xff]
        %v355 = vld [vmem:[%s251 + $0x60] sm:$0xff]
        %v356 = vld [vmem:[%s251 + $0x68] sm:$0xff]
        %v357 = vld [vmem:[%s251 + $0x70] sm:$0xff]
        %v358 = vld [vmem:[%s251 + $0x78] sm:$0xff]
        %v359 = vld [vmem:[%s293] sm:$0xff]
        %v360 = vld [vmem:[%s293 + $0x8] sm:$0xff]
        %v361 = vld [vmem:[%s293 + $0x10] sm:$0xff]
        %v362 = vld [vmem:[%s293 + $0x18] sm:$0xff]
        %v363 = vld [vmem:[%s293 + $0x20] sm:$0xff]
        %v364 = vld [vmem:[%s293 + $0x28] sm:$0xff]
        %v365 = vld [vmem:[%s293 + $0x30] sm:$0xff]
        %v366 = vld [vmem:[%s293 + $0x38] sm:$0xff]
        %v367 = vld [vmem:[%s293 + $0x40] sm:$0xff]
        %v368 = vld [vmem:[%s293 + $0x48] sm:$0xff]
        %v369 = vld [vmem:[%s293 + $0x50] sm:$0xff]
        %v370 = vld [vmem:[%s293 + $0x58] sm:$0xff]
        %v371 = vld [vmem:[%s293 + $0x60] sm:$0xff]
        %v372 = vld [vmem:[%s293 + $0x68] sm:$0xff]
        %v373 = vld [vmem:[%s293 + $0x70] sm:$0xff]
        %v374 = vld [vmem:[%s293 + $0x78] sm:$0xff]
        %375 = vmatprep.subr.mxu0 0.0
        %376 = vmatpush1.msra.mxu0 %v374
        %377 = vmatprep.subr.mxu0 0.0
        %378 = vmatpush1.msra.mxu0 %v373
        %379 = vmatprep.subr.mxu0 0.0
        %380 = vmatpush1.msra.mxu0 %v372
        %381 = vmatprep.subr.mxu0 0.0
        %382 = vmatpush1.msra.mxu0 %v371
        %383 = vmatprep.subr.mxu0 0.0
        %384 = vmatpush1.msra.mxu0 %v370
        %385 = vmatprep.subr.mxu0 0.0
        %386 = vmatpush1.msra.mxu0 %v369
        %387 = vmatprep.subr.mxu0 0.0
        %388 = vmatpush1.msra.mxu0 %v368
        %389 = vmatprep.subr.mxu0 0.0
        %390 = vmatpush1.msra.mxu0 %v367
        %391 = vmatprep.subr.mxu0 0.0
        %392 = vmatpush1.msra.mxu0 %v366
        %393 = vmatprep.subr.mxu0 0.0
        %394 = vmatpush1.msra.mxu0 %v365
        %395 = vmatprep.subr.mxu0 0.0
        %396 = vmatpush1.msra.mxu0 %v364
        %397 = vmatprep.subr.mxu0 0.0
        %398 = vmatpush1.msra.mxu0 %v363
        %399 = vmatprep.subr.mxu0 0.0
        %400 = vmatpush1.msra.mxu0 %v362
        %401 = vmatprep.subr.mxu0 0.0
        %402 = vmatpush1.msra.mxu0 %v361
        %403 = vmatprep.subr.mxu0 0.0
        %404 = vmatpush1.msra.mxu0 %v360
        %405 = vmatprep.subr.mxu0 0.0
        %406 = vmatpush1.msra.mxu0 %v359
        %407 = vmatprep.subr.mxu0 0.0
        %408 = vmatpush2.msra.mxu0 0.0
        %409 = vmatprep.subr.mxu0 0.0
        %410 = vmatpush2.msra.mxu0 0.0
        %411 = vmatprep.subr.mxu0 0.0
        %412 = vmatpush2.msra.mxu0 0.0
        %413 = vmatprep.subr.mxu0 0.0
        %414 = vmatpush2.msra.mxu0 0.0
        %415 = vmatprep.subr.mxu0 0.0
        %416 = vmatpush2.msra.mxu0 0.0
        %417 = vmatprep.subr.mxu0 0.0
        %418 = vmatpush2.msra.mxu0 0.0
        %419 = vmatprep.subr.mxu0 0.0
        %420 = vmatpush2.msra.mxu0 0.0
        %421 = vmatprep.subr.mxu0 0.0
        %422 = vmatpush2.msra.mxu0 0.0
        %423 = vmatprep.subr.mxu0 0.0
        %424 = vmatpush2.msra.mxu0 0.0
        %425 = vmatprep.subr.mxu0 0.0
        %426 = vmatpush2.msra.mxu0 0.0
        %427 = vmatprep.subr.mxu0 0.0
        %428 = vmatpush2.msra.mxu0 0.0
        %429 = vmatprep.subr.mxu0 0.0
        %430 = vmatpush2.msra.mxu0 0.0
        %431 = vmatprep.subr.mxu0 0.0
        %432 = vmatpush2.msra.mxu0 0.0
        %433 = vmatprep.subr.mxu0 0.0
        %434 = vmatpush2.msra.mxu0 0.0
        %435 = vmatprep.subr.mxu0 0.0
        %436 = vmatpush2.msra.mxu0 0.0
        %437 = vmatprep.subr.mxu0 0.0
        %438 = vmatpush2.msra.mxu0 0.0
        %439 = vmatprep.mubr.f32.mxu0 0.0
        %440 = vmatmul.mubr.f32.gmra.mxu0 %v343
        %v441 = vpop.f32.mrf.mxu0
        %v442 = vadd.f32 0.0, %v441
        %v443 = vpop.f32.mrf.mxu0
        %444 = vmatprep.mubr.f32.mxu0 0.0
        %445 = vmatmul.mubr.f32.gmra.mxu0 %v344
        %v446 = vpop.f32.mrf.mxu0
        %v447 = vadd.f32 0.0, %v446
        %v448 = vpop.f32.mrf.mxu0
        %449 = vmatprep.mubr.f32.mxu0 0.0
        %450 = vmatmul.mubr.f32.gmra.mxu0 %v345
        %v451 = vpop.f32.mrf.mxu0
        %v452 = vadd.f32 0.0, %v451
        %v453 = vpop.f32.mrf.mxu0
        %454 = vmatprep.mubr.f32.mxu0 0.0
        %455 = vmatmul.mubr.f32.gmra.mxu0 %v346
        %v456 = vpop.f32.mrf.mxu0
        %v457 = vadd.f32 0.0, %v456
        %v458 = vpop.f32.mrf.mxu0
        %459 = vmatprep.mubr.f32.mxu0 0.0
        %460 = vmatmul.mubr.f32.gmra.mxu0 %v347
        %v461 = vpop.f32.mrf.mxu0
        %v462 = vadd.f32 0.0, %v461
        %v463 = vpop.f32.mrf.mxu0
        %464 = vmatprep.mubr.f32.mxu0 0.0
        %465 = vmatmul.mubr.f32.gmra.mxu0 %v348
        %v466 = vpop.f32.mrf.mxu0
        %v467 = vadd.f32 0.0, %v466
        %v468 = vpop.f32.mrf.mxu0
        %469 = vmatprep.mubr.f32.mxu0 0.0
        %470 = vmatmul.mubr.f32.gmra.mxu0 %v349
        %v471 = vpop.f32.mrf.mxu0
        %v472 = vadd.f32 0.0, %v471
        %v473 = vpop.f32.mrf.mxu0
        %474 = vmatprep.mubr.f32.mxu0 0.0
        %475 = vmatmul.mubr.f32.gmra.mxu0 %v350
        %v476 = vpop.f32.mrf.mxu0
        %v477 = vadd.f32 0.0, %v476
        %v478 = vpop.f32.mrf.mxu0
        %479 = vmatprep.mubr.f32.mxu0 0.0
        %480 = vmatmul.mubr.f32.gmra.mxu0 %v351
        %v481 = vpop.f32.mrf.mxu0
        %v482 = vadd.f32 0.0, %v481
        %v483 = vpop.f32.mrf.mxu0
        %484 = vmatprep.mubr.f32.mxu0 0.0
        %485 = vmatmul.mubr.f32.gmra.mxu0 %v352
        %v486 = vpop.f32.mrf.mxu0
        %v487 = vadd.f32 0.0, %v486
        %v488 = vpop.f32.mrf.mxu0
        %489 = vmatprep.mubr.f32.mxu0 0.0
        %490 = vmatmul.mubr.f32.gmra.mxu0 %v353
        %v491 = vpop.f32.mrf.mxu0
        %v492 = vadd.f32 0.0, %v491
        %v493 = vpop.f32.mrf.mxu0
        %494 = vmatprep.mubr.f32.mxu0 0.0
        %495 = vmatmul.mubr.f32.gmra.mxu0 %v354
        %v496 = vpop.f32.mrf.mxu0
        %v497 = vadd.f32 0.0, %v496
        %v498 = vpop.f32.mrf.mxu0
        %499 = vmatprep.mubr.f32.mxu0 0.0
        %500 = vmatmul.mubr.f32.gmra.mxu0 %v355
        %v501 = vpop.f32.mrf.mxu0
        %v502 = vadd.f32 0.0, %v501
        %v503 = vpop.f32.mrf.mxu0
        %504 = vmatprep.mubr.f32.mxu0 0.0
        %505 = vmatmul.mubr.f32.gmra.mxu0 %v356
        %v506 = vpop.f32.mrf.mxu0
        %v507 = vadd.f32 0.0, %v506
        %v508 = vpop.f32.mrf.mxu0
        %509 = vmatprep.mubr.f32.mxu0 0.0
        %510 = vmatmul.mubr.f32.gmra.mxu0 %v357
        %v511 = vpop.f32.mrf.mxu0
        %v512 = vadd.f32 0.0, %v511
        %v513 = vpop.f32.mrf.mxu0
        %514 = vmatprep.mubr.f32.mxu0 0.0
        %515 = vmatmul.mubr.f32.gmra.mxu0 %v358
        %v516 = vpop.f32.mrf.mxu0
        %v517 = vadd.f32 0.0, %v516
        %v518 = vpop.f32.mrf.mxu0
        %519 = vdwg.mxu0
        %v520 = vadd.f32 %v327, %v442
        %v521 = vadd.f32 %v328, %v447
        %v522 = vadd.f32 %v329, %v452
        %v523 = vadd.f32 %v330, %v457
        %v524 = vadd.f32 %v331, %v462
        %v525 = vadd.f32 %v332, %v467
        %v526 = vadd.f32 %v333, %v472
        %v527 = vadd.f32 %v334, %v477
        %v528 = vadd.f32 %v335, %v482
        %v529 = vadd.f32 %v336, %v487
        %v530 = vadd.f32 %v337, %v492
        %v531 = vadd.f32 %v338, %v497
        %v532 = vadd.f32 %v339, %v502
        %v533 = vadd.f32 %v340, %v507
        %v534 = vadd.f32 %v341, %v512
        %v535 = vadd.f32 %v342, %v517
        %536 = vst [vmem:[#allocation2] sm:$0xff] %v520
        %537 = vst [vmem:[#allocation2 + $0x8] sm:$0xff] %v521
        %538 = vst [vmem:[#allocation2 + $0x10] sm:$0xff] %v522
        %539 = vst [vmem:[#allocation2 + $0x18] sm:$0xff] %v523
        %540 = vst [vmem:[#allocation2 + $0x20] sm:$0xff] %v524
        %541 = vst [vmem:[#allocation2 + $0x28] sm:$0xff] %v525
        %542 = vst [vmem:[#allocation2 + $0x30] sm:$0xff] %v526
        %543 = vst [vmem:[#allocation2 + $0x38] sm:$0xff] %v527
        %544 = vst [vmem:[#allocation2 + $0x40] sm:$0xff] %v528
        %545 = vst [vmem:[#allocation2 + $0x48] sm:$0xff] %v529
        %546 = vst [vmem:[#allocation2 + $0x50] sm:$0xff] %v530
        %547 = vst [vmem:[#allocation2 + $0x58] sm:$0xff] %v531
        %548 = vst [vmem:[#allocation2 + $0x60] sm:$0xff] %v532
        %549 = vst [vmem:[#allocation2 + $0x68] sm:$0xff] %v533
        %550 = vst [vmem:[#allocation2 + $0x70] sm:$0xff] %v534
        %551 = vst [vmem:[#allocation2 + $0x78] sm:$0xff] %v535
        %p552 = scmp.eq.s32.totalorder %s24, 1
        // Predicated region
        $region49: #{graphsage_recommender_forward.2} parent=39 // pred_check
          %p553 = pneg %p552
        $region50: #{graphsage_recommender_forward.2} parent=39 // pred_check_branch
          %555 = sbr.rel (%p553) target = $region52
        $region51: #{graphsage_recommender_forward.2} parent=39 // pred_region
          %v556 = vld [vmem:[%s299] sm:$0xff]
          %v557 = vld [vmem:[%s299 + $0x8] sm:$0xff]
          %v558 = vld [vmem:[%s299 + $0x10] sm:$0xff]
          %v559 = vld [vmem:[%s299 + $0x18] sm:$0xff]
          %v560 = vld [vmem:[%s299 + $0x20] sm:$0xff]
          %v561 = vld [vmem:[%s299 + $0x28] sm:$0xff]
          %v562 = vld [vmem:[%s299 + $0x30] sm:$0xff]
          %v563 = vld [vmem:[%s299 + $0x38] sm:$0xff]
          %v564 = vld [vmem:[%s299 + $0x40] sm:$0xff]
          %v565 = vld [vmem:[%s299 + $0x48] sm:$0xff]
          %v566 = vld [vmem:[%s299 + $0x50] sm:$0xff]
          %v567 = vld [vmem:[%s299 + $0x58] sm:$0xff]
          %v568 = vld [vmem:[%s299 + $0x60] sm:$0xff]
          %v569 = vld [vmem:[%s299 + $0x68] sm:$0xff]
          %v570 = vld [vmem:[%s299 + $0x70] sm:$0xff]
          %v571 = vld [vmem:[%s299 + $0x78] sm:$0xff]
          %v572 = vld [vmem:[#allocation2] sm:$0xff]
          %v573 = vld [vmem:[#allocation2 + $0x8] sm:$0xff]
          %v574 = vld [vmem:[#allocation2 + $0x10] sm:$0xff]
          %v575 = vld [vmem:[#allocation2 + $0x18] sm:$0xff]
          %v576 = vld [vmem:[#allocation2 + $0x20] sm:$0xff]
          %v577 = vld [vmem:[#allocation2 + $0x28] sm:$0xff]
          %v578 = vld [vmem:[#allocation2 + $0x30] sm:$0xff]
          %v579 = vld [vmem:[#allocation2 + $0x38] sm:$0xff]
          %v580 = vld [vmem:[#allocation2 + $0x40] sm:$0xff]
          %v581 = vld [vmem:[#allocation2 + $0x48] sm:$0xff]
          %v582 = vld [vmem:[#allocation2 + $0x50] sm:$0xff]
          %v583 = vld [vmem:[#allocation2 + $0x58] sm:$0xff]
          %v584 = vld [vmem:[#allocation2 + $0x60] sm:$0xff]
          %v585 = vld [vmem:[#allocation2 + $0x68] sm:$0xff]
          %v586 = vld [vmem:[#allocation2 + $0x70] sm:$0xff]
          %v587 = vld [vmem:[#allocation2 + $0x78] sm:$0xff]
          %v588 = vld [vmem:[%s3] sm:$0xff]
          %v589 = vld [vmem:[%s3 + $0x8] sm:$0xff]
          %v590 = vld [vmem:[%s3 + $0x10] sm:$0xff]
          %v591 = vld [vmem:[%s3 + $0x18] sm:$0xff]
          %v592 = vld [vmem:[%s3 + $0x20] sm:$0xff]
          %v593 = vld [vmem:[%s3 + $0x28] sm:$0xff]
          %v594 = vld [vmem:[%s3 + $0x30] sm:$0xff]
          %v595 = vld [vmem:[%s3 + $0x38] sm:$0xff]
          %v596 = vld [vmem:[%s3 + $0x40] sm:$0xff]
          %v597 = vld [vmem:[%s3 + $0x48] sm:$0xff]
          %v598 = vld [vmem:[%s3 + $0x50] sm:$0xff]
          %v599 = vld [vmem:[%s3 + $0x58] sm:$0xff]
          %v600 = vld [vmem:[%s3 + $0x60] sm:$0xff]
          %v601 = vld [vmem:[%s3 + $0x68] sm:$0xff]
          %v602 = vld [vmem:[%s3 + $0x70] sm:$0xff]
          %v603 = vld [vmem:[%s3 + $0x78] sm:$0xff]
          %v604 = vld [vmem:[%s3 + $0x80] sm:$0xff]
          %v605 = vld [vmem:[%s3 + $0x88] sm:$0xff]
          %v606 = vld [vmem:[%s3 + $0x90] sm:$0xff]
          %v607 = vld [vmem:[%s3 + $0x98] sm:$0xff]
          %v608 = vld [vmem:[%s3 + $0xa0] sm:$0xff]
          %v609 = vld [vmem:[%s3 + $0xa8] sm:$0xff]
          %v610 = vld [vmem:[%s3 + $0xb0] sm:$0xff]
          %v611 = vld [vmem:[%s3 + $0xb8] sm:$0xff]
          %v612 = vld [vmem:[%s3 + $0xc0] sm:$0xff]
          %v613 = vld [vmem:[%s3 + $0xc8] sm:$0xff]
          %v614 = vld [vmem:[%s3 + $0xd0] sm:$0xff]
          %v615 = vld [vmem:[%s3 + $0xd8] sm:$0xff]
          %v616 = vld [vmem:[%s3 + $0xe0] sm:$0xff]
          %v617 = vld [vmem:[%s3 + $0xe8] sm:$0xff]
          %v618 = vld [vmem:[%s3 + $0xf0] sm:$0xff]
          %v619 = vld [vmem:[%s3 + $0xf8] sm:$0xff]
          %v620 = vld [vmem:[%s4] sm:$0x1]
          %v622 = vlaneseq
          %v623 = vshrl.u32 %v622, 7
          %v624 = vsub.s32 0, %v623
          %v625 = vrot.slane %v620, %v624
          %627 = vmatprep.subr.mxu0 0.0
          %628 = vmatpush1.msra.mxu0 %v603
          %629 = vmatprep.subr.mxu0 0.0
          %630 = vmatpush1.msra.mxu0 %v602
          %631 = vmatprep.subr.mxu0 0.0
          %632 = vmatpush1.msra.mxu0 %v601
          %633 = vmatprep.subr.mxu0 0.0
          %634 = vmatpush1.msra.mxu0 %v600
          %635 = vmatprep.subr.mxu0 0.0
          %636 = vmatpush1.msra.mxu0 %v599
          %637 = vmatprep.subr.mxu0 0.0
          %638 = vmatpush1.msra.mxu0 %v598
          %639 = vmatprep.subr.mxu0 0.0
          %640 = vmatpush1.msra.mxu0 %v597
          %641 = vmatprep.subr.mxu0 0.0
          %642 = vmatpush1.msra.mxu0 %v596
          %643 = vmatprep.subr.mxu0 0.0
          %644 = vmatpush1.msra.mxu0 %v595
          %645 = vmatprep.subr.mxu0 0.0
          %646 = vmatpush1.msra.mxu0 %v594
          %647 = vmatprep.subr.mxu0 0.0
          %648 = vmatpush1.msra.mxu0 %v593
          %649 = vmatprep.subr.mxu0 0.0
          %650 = vmatpush1.msra.mxu0 %v592
          %651 = vmatprep.subr.mxu0 0.0
          %652 = vmatpush1.msra.mxu0 %v591
          %653 = vmatprep.subr.mxu0 0.0
          %654 = vmatpush1.msra.mxu0 %v590
          %655 = vmatprep.subr.mxu0 0.0
          %656 = vmatpush1.msra.mxu0 %v589
          %657 = vmatprep.subr.mxu0 0.0
          %658 = vmatpush1.msra.mxu0 %v588
          %659 = vmatprep.subr.mxu0 0.0
          %660 = vmatpush2.msra.mxu0 %v619
          %661 = vmatprep.subr.mxu0 0.0
          %662 = vmatpush2.msra.mxu0 %v618
          %663 = vmatprep.subr.mxu0 0.0
          %664 = vmatpush2.msra.mxu0 %v617
          %665 = vmatprep.subr.mxu0 0.0
          %666 = vmatpush2.msra.mxu0 %v616
          %667 = vmatprep.subr.mxu0 0.0
          %668 = vmatpush2.msra.mxu0 %v615
          %669 = vmatprep.subr.mxu0 0.0
          %670 = vmatpush2.msra.mxu0 %v614
          %671 = vmatprep.subr.mxu0 0.0
          %672 = vmatpush2.msra.mxu0 %v613
          %673 = vmatprep.subr.mxu0 0.0
          %674 = vmatpush2.msra.mxu0 %v612
          %675 = vmatprep.subr.mxu0 0.0
          %676 = vmatpush2.msra.mxu0 %v611
          %677 = vmatprep.subr.mxu0 0.0
          %678 = vmatpush2.msra.mxu0 %v610
          %679 = vmatprep.subr.mxu0 0.0
          %680 = vmatpush2.msra.mxu0 %v609
          %681 = vmatprep.subr.mxu0 0.0
          %682 = vmatpush2.msra.mxu0 %v608
          %683 = vmatprep.subr.mxu0 0.0
          %684 = vmatpush2.msra.mxu0 %v607
          %685 = vmatprep.subr.mxu0 0.0
          %686 = vmatpush2.msra.mxu0 %v606
          %687 = vmatprep.subr.mxu0 0.0
          %688 = vmatpush2.msra.mxu0 %v605
          %689 = vmatprep.subr.mxu0 0.0
          %690 = vmatpush2.msra.mxu0 %v604
          %691 = vmatprep.mubr.f32.mxu0 %v572
          %692 = vmatmul.mubr.f32.gmra.mxu0 %v556
          %v693 = vpop.f32.mrf.mxu0
          %v694 = vadd.f32 %v625, %v693
          %v695 = vpop.f32.mrf.mxu0
          %696 = vmatprep.mubr.f32.mxu0 %v573
          %697 = vmatmul.mubr.f32.gmra.mxu0 %v557
          %v698 = vpop.f32.mrf.mxu0
          %v699 = vadd.f32 %v625, %v698
          %v700 = vpop.f32.mrf.mxu0
          %701 = vmatprep.mubr.f32.mxu0 %v574
          %702 = vmatmul.mubr.f32.gmra.mxu0 %v558
          %v703 = vpop.f32.mrf.mxu0
          %v704 = vadd.f32 %v625, %v703
          %v705 = vpop.f32.mrf.mxu0
          %706 = vmatprep.mubr.f32.mxu0 %v575
          %707 = vmatmul.mubr.f32.gmra.mxu0 %v559
          %v708 = vpop.f32.mrf.mxu0
          %v709 = vadd.f32 %v625, %v708
          %v710 = vpop.f32.mrf.mxu0
          %711 = vmatprep.mubr.f32.mxu0 %v576
          %712 = vmatmul.mubr.f32.gmra.mxu0 %v560
          %v713 = vpop.f32.mrf.mxu0
          %v714 = vadd.f32 %v625, %v713
          %v715 = vpop.f32.mrf.mxu0
          %716 = vmatprep.mubr.f32.mxu0 %v577
          %717 = vmatmul.mubr.f32.gmra.mxu0 %v561
          %v718 = vpop.f32.mrf.mxu0
          %v719 = vadd.f32 %v625, %v718
          %v720 = vpop.f32.mrf.mxu0
          %721 = vmatprep.mubr.f32.mxu0 %v578
          %722 = vmatmul.mubr.f32.gmra.mxu0 %v562
          %v723 = vpop.f32.mrf.mxu0
          %v724 = vadd.f32 %v625, %v723
          %v725 = vpop.f32.mrf.mxu0
          %726 = vmatprep.mubr.f32.mxu0 %v579
          %727 = vmatmul.mubr.f32.gmra.mxu0 %v563
          %v728 = vpop.f32.mrf.mxu0
          %v729 = vadd.f32 %v625, %v728
          %v730 = vpop.f32.mrf.mxu0
          %731 = vmatprep.mubr.f32.mxu0 %v580
          %732 = vmatmul.mubr.f32.gmra.mxu0 %v564
          %v733 = vpop.f32.mrf.mxu0
          %v734 = vadd.f32 %v625, %v733
          %v735 = vpop.f32.mrf.mxu0
          %736 = vmatprep.mubr.f32.mxu0 %v581
          %737 = vmatmul.mubr.f32.gmra.mxu0 %v565
          %v738 = vpop.f32.mrf.mxu0
          %v739 = vadd.f32 %v625, %v738
          %v740 = vpop.f32.mrf.mxu0
          %741 = vmatprep.mubr.f32.mxu0 %v582
          %742 = vmatmul.mubr.f32.gmra.mxu0 %v566
          %v743 = vpop.f32.mrf.mxu0
          %v744 = vadd.f32 %v625, %v743
          %v745 = vpop.f32.mrf.mxu0
          %746 = vmatprep.mubr.f32.mxu0 %v583
          %747 = vmatmul.mubr.f32.gmra.mxu0 %v567
          %v748 = vpop.f32.mrf.mxu0
          %v749 = vadd.f32 %v625, %v748
          %v750 = vpop.f32.mrf.mxu0
          %751 = vmatprep.mubr.f32.mxu0 %v584
          %752 = vmatmul.mubr.f32.gmra.mxu0 %v568
          %v753 = vpop.f32.mrf.mxu0
          %v754 = vadd.f32 %v625, %v753
          %v755 = vpop.f32.mrf.mxu0
          %756 = vmatprep.mubr.f32.mxu0 %v585
          %757 = vmatmul.mubr.f32.gmra.mxu0 %v569
          %v758 = vpop.f32.mrf.mxu0
          %v759 = vadd.f32 %v625, %v758
          %v760 = vpop.f32.mrf.mxu0
          %761 = vmatprep.mubr.f32.mxu0 %v586
          %762 = vmatmul.mubr.f32.gmra.mxu0 %v570
          %v763 = vpop.f32.mrf.mxu0
          %v764 = vadd.f32 %v625, %v763
          %v765 = vpop.f32.mrf.mxu0
          %766 = vmatprep.mubr.f32.mxu0 %v587
          %767 = vmatmul.mubr.f32.gmra.mxu0 %v571
          %v768 = vpop.f32.mrf.mxu0
          %v769 = vadd.f32 %v625, %v768
          %v770 = vpop.f32.mrf.mxu0
          %771 = vdwg.mxu0
          %v772 = vmax.f32 %v694, 0.0
          %v773 = vmax.f32 %v699, 0.0
          %v774 = vmax.f32 %v704, 0.0
          %v775 = vmax.f32 %v709, 0.0
          %v776 = vmax.f32 %v714, 0.0
          %v777 = vmax.f32 %v719, 0.0
          %v778 = vmax.f32 %v724, 0.0
          %v779 = vmax.f32 %v729, 0.0
          %v780 = vmax.f32 %v734, 0.0
          %v781 = vmax.f32 %v739, 0.0
          %v782 = vmax.f32 %v744, 0.0
          %v783 = vmax.f32 %v749, 0.0
          %v784 = vmax.f32 %v754, 0.0
          %v785 = vmax.f32 %v759, 0.0
          %v786 = vmax.f32 %v764, 0.0
          %v787 = vmax.f32 %v769, 0.0
          %788 = vst [vmem:[%s305] sm:$0xff] %v772
          %789 = vst [vmem:[%s305 + $0x8] sm:$0xff] %v773
          %790 = vst [vmem:[%s305 + $0x10] sm:$0xff] %v774
          %791 = vst [vmem:[%s305 + $0x18] sm:$0xff] %v775
          %792 = vst [vmem:[%s305 + $0x20] sm:$0xff] %v776
          %793 = vst [vmem:[%s305 + $0x28] sm:$0xff] %v777
          %794 = vst [vmem:[%s305 + $0x30] sm:$0xff] %v778
          %795 = vst [vmem:[%s305 + $0x38] sm:$0xff] %v779
          %796 = vst [vmem:[%s305 + $0x40] sm:$0xff] %v780
          %797 = vst [vmem:[%s305 + $0x48] sm:$0xff] %v781
          %798 = vst [vmem:[%s305 + $0x50] sm:$0xff] %v782
          %799 = vst [vmem:[%s305 + $0x58] sm:$0xff] %v783
          %800 = vst [vmem:[%s305 + $0x60] sm:$0xff] %v784
          %801 = vst [vmem:[%s305 + $0x68] sm:$0xff] %v785
          %802 = vst [vmem:[%s305 + $0x70] sm:$0xff] %v786
          %803 = vst [vmem:[%s305 + $0x78] sm:$0xff] %v787
        $region52: #{graphsage_recommender_forward.2} parent=39 // pred_fallthru
          _
        %s804 = smul.u32 16, %s23
        %p805 = scmp.lt.s32.totalorder %s804, 31
        %s806 = scalar_select %p805, %s804, 31
        %s807 = smul.addr %s806, 8
        %s808 = scalar_lea.vmem %s5, %s807
        // Predicated region
        $region53: #{graphsage_recommender_forward.2} parent=39 // pred_check
          %p809 = pneg %p171
        $region54: #{graphsage_recommender_forward.2} parent=39 // pred_check_branch
          %811 = sbr.rel (%p809) target = $region56
        $region55: #{graphsage_recommender_forward.2} parent=39 // pred_region
          %s812 = smul.u32 16, %s23
        $region56: #{graphsage_recommender_forward.2} parent=39 // pred_fallthru
          _
      $region40: #{graphsage_recommender_forward.2} parent=5 // pred_fallthru
        _
      %p813 = scmp.le.s32.totalorder 2, %s14
      // Predicated region
      $region57: #{graphsage_recommender_forward.2} parent=5 // pred_check
        %p814 = pneg %p813
      $region58: #{graphsage_recommender_forward.2} parent=5 // pred_check_branch
        %816 = sbr.rel (%p814) target = $region60
      $region59: #{graphsage_recommender_forward.2} parent=5 // pred_region
        %s817 = ssub.s32 %s14, 2
        // Predicated region
        $region61: #{graphsage_recommender_forward.2} parent=59 // pred_check
          %p818 = pneg %p177
        $region62: #{graphsage_recommender_forward.2} parent=59 // pred_check_branch
          %820 = sbr.rel (%p818) target = $region64
        $region63: #{graphsage_recommender_forward.2} parent=59 // pred_region
          %s821 = smul.u32 16, %s25
          %p822 = scmp.lt.s32.totalorder %s821, 31
          %s823 = scalar_select %p822, %s821, 31
          %s824 = smul.addr %s823, 8
          %s825 = scalar_lea.vmem %s5, %s824
        $region64: #{graphsage_recommender_forward.2} parent=59 // pred_fallthru
          _
      $region60: #{graphsage_recommender_forward.2} parent=5 // pred_fallthru
        _
    $region6: #{graphsage_recommender_forward.2} parent=1 // loop_footer
      %s18 = sadd.s32 1, %s14
    $region7: #{graphsage_recommender_forward.2} parent=1 // loop_footer_branch
      %13 = sbr.rel target = $region3
    $region8: #{graphsage_recommender_forward.2} parent=1 // loop_exit
      _
    %826 = vsyncpa [#allocation4], 1
    %s827 = scalar_lea.sflag [#allocation4], 1
    %828 = vsyncpa %s827, 1

// kernel: graphsage_recommender_forward.3
$region0: #{graphsage_recommender_forward.3}
  #allocation0 [shape = 'u32[]', space=smem, size = 0x4, offset = 0x4, fixed_abs, tag = 'smem constant byte address 0x4 - core index']
  #allocation1 [shape = 'u32[144,128]{1,0:T(1,128)}', space=vmem, size = 0x12000, scoped, tag = 'internal scratch']
  #allocation2 [shape = 'f32[129,256]{1,0:T(8,128)}', space=vmem, size = 0x22000, scoped, tag = 'scratch operand']
  %s0 = inlined_call_operand.vmem [shape: s32[1,256], index: 0, kind: input, shape index: {}]
  %s1 = inlined_call_operand.vmem [shape: s32[1,256], index: 1, kind: input, shape index: {}]
  %s2 = inlined_call_operand.vmem [shape: f32[129,256], index: 2, kind: input, shape index: {}]
  %s3 = inlined_call_operand.hbm [shape: f32[1,256], index: 3, kind: output, shape index: {}]
  %s4 = sld [smem:[#allocation0]]
  $region91: #{graphsage_recommender_forward.3} parent=0
    _
  %s6 = ssub.s32 1, %s4
  %s7 = scalar_select 0, %s6, %s4
  $region1: #{graphsage_recommender_forward.3} parent=0
    #allocation3 [shape = 'u8[139264]{0}', space=vmem, size = 0x22000, scoped, tag = 'input window, operand 2']
    #allocation4 [shape = 'u8[1024]{0}', space=vmem, size = 0x400, scoped, tag = 'output window, operand 0']
    #allocation5 [shape = 's32[2]{0}', space=sflag, size = 0x8, scoped, tag = 'scoped memory for graphsage_recommender_forward.3']
    %8 = vsyncpa [#allocation5], 0
    %s9 = scalar_lea.sflag [#allocation5], 1
    %10 = vsyncpa %s9, 0
    loop: start=0, step=1, limit=6
    $region2: #{graphsage_recommender_forward.3} parent=1 // loop_pre_header
      _
    $region3: #{graphsage_recommender_forward.3} parent=1 // loop_header
      %s12 = sphi 0, %s16
      %p13 = scmp.ge.s32.totalorder %s12, 6
      %s19 = sphi 0, %s31
      %s20 = sphi 0, %s27
      %s21 = sphi 0, %s19
      %s22 = sphi 0, %s20
      %s23 = sphi 0, %s21
      %s24 = sphi 0, %s22
      %s34 = sphi 0, %s36
      %s37 = sphi 0, %s34
      %s38 = sphi 0, %s37
      %s54 = sphi 0, %s38
      %s60 = sphi 0, %s62
      %s63 = sphi 0, %s60
      %s64 = sphi 0, %s63
      %s80 = sphi 0, %s64
      %s86 = sphi 0, %s88
      %s89 = sphi 0, %s86
      %s90 = sphi 0, %s89
      %s106 = sphi 0, %s90
      %s112 = sphi 0, %s114
      %s115 = sphi 0, %s112
      %s116 = sphi 0, %s115
      %s132 = sphi 0, %s116
    $region4: #{graphsage_recommender_forward.3} parent=1 // loop_header_branch
      %15 = sbr.rel (%p13) target = $region8
    $region5: #{graphsage_recommender_forward.3} parent=1 // loop_body
      %s17 = ssub.s32 %s12, 1
      %s18 = ssub.s32 %s12, 2
      %s25 = sadd.s32 1, %s20
      %p26 = scmp.ge.s32.totalorder %s25, 2
      %s27 = scalar_select %p26, 0, %s25
      %s28 = sadd.s32 1, %s19
      %s29 = scalar_select %p26, %s28, %s19
      %p30 = scmp.ge.s32.totalorder %s29, 2
      %s31 = scalar_select %p30, 0, %s29
      %s32 = ssub.s32 %s19, %s31
      %p33 = scmp.eq.s32.totalorder %s32, 0
      %s35 = sadd.s32 %s34, 1
      %s36 = scalar_select %p33, %s34, %s35
      %p39 = pneg %p33
      %p40 = scmp.eq.s32.totalorder %s12, 3
      %p41 = por %p39, %p40
      %p42 = scmp.ne.s32.totalorder %s34, %s37
      %p43 = scmp.eq.s32.totalorder %s12, 0
      %p44 = por %p42, %p43
      %p45 = scmp.ne.s32.totalorder %s34, %s37
      %p46 = scmp.eq.s32.totalorder %s17, 3
      %p47 = por %p45, %p46
      %p48 = scmp.ne.s32.totalorder %s37, %s38
      %p49 = scmp.eq.s32.totalorder %s17, 0
      %p50 = por %p48, %p49
      %p51 = scmp.ne.s32.totalorder %s37, %s38
      %p52 = scmp.eq.s32.totalorder %s18, 3
      %p53 = por %p51, %p52
      %p55 = scmp.ne.s32.totalorder %s38, %s54
      %p56 = scmp.eq.s32.totalorder %s18, 0
      %p57 = por %p55, %p56
      %s58 = ssub.s32 %s19, %s31
      %p59 = scmp.eq.s32.totalorder %s58, 0
      %s61 = sadd.s32 %s60, 1
      %s62 = scalar_select %p59, %s60, %s61
      %p65 = pneg %p59
      %p66 = scmp.eq.s32.totalorder %s12, 3
      %p67 = por %p65, %p66
      %p68 = scmp.ne.s32.totalorder %s60, %s63
      %p69 = scmp.eq.s32.totalorder %s12, 0
      %p70 = por %p68, %p69
      %p71 = scmp.ne.s32.totalorder %s60, %s63
      %p72 = scmp.eq.s32.totalorder %s17, 3
      %p73 = por %p71, %p72
      %p74 = scmp.ne.s32.totalorder %s63, %s64
      %p75 = scmp.eq.s32.totalorder %s17, 0
      %p76 = por %p74, %p75
      %p77 = scmp.ne.s32.totalorder %s63, %s64
      %p78 = scmp.eq.s32.totalorder %s18, 3
      %p79 = por %p77, %p78
      %p81 = scmp.ne.s32.totalorder %s64, %s80
      %p82 = scmp.eq.s32.totalorder %s18, 0
      %p83 = por %p81, %p82
      %s84 = ssub.s32 %s20, %s27
      %p85 = scmp.eq.s32.totalorder %s84, 0
      %s87 = sadd.s32 %s86, 1
      %s88 = scalar_select %p85, %s86, %s87
      %p91 = pneg %p85
      %p92 = scmp.eq.s32.totalorder %s12, 3
      %p93 = por %p91, %p92
      %p94 = scmp.ne.s32.totalorder %s86, %s89
      %p95 = scmp.eq.s32.totalorder %s12, 0
      %p96 = por %p94, %p95
      %p97 = scmp.ne.s32.totalorder %s86, %s89
      %p98 = scmp.eq.s32.totalorder %s17, 3
      %p99 = por %p97, %p98
      %p100 = scmp.ne.s32.totalorder %s89, %s90
      %p101 = scmp.eq.s32.totalorder %s17, 0
      %p102 = por %p100, %p101
      %p103 = scmp.ne.s32.totalorder %s89, %s90
      %p104 = scmp.eq.s32.totalorder %s18, 3
      %p105 = por %p103, %p104
      %p107 = scmp.ne.s32.totalorder %s90, %s106
      %p108 = scmp.eq.s32.totalorder %s18, 0
      %p109 = por %p107, %p108
      %s110 = ssub.s32 %s19, %s31
      %p111 = scmp.eq.s32.totalorder %s110, 0
      %s113 = sadd.s32 %s112, 1
      %s114 = scalar_select %p111, %s112, %s113
      %p117 = pneg %p111
      %p118 = scmp.eq.s32.totalorder %s12, 3
      %p119 = por %p117, %p118
      %p120 = scmp.ne.s32.totalorder %s112, %s115
      %p121 = scmp.eq.s32.totalorder %s12, 0
      %p122 = por %p120, %p121
      %p123 = scmp.ne.s32.totalorder %s112, %s115
      %p124 = scmp.eq.s32.totalorder %s17, 3
      %p125 = por %p123, %p124
      %p126 = scmp.ne.s32.totalorder %s115, %s116
      %p127 = scmp.eq.s32.totalorder %s17, 0
      %p128 = por %p126, %p127
      %p129 = scmp.ne.s32.totalorder %s115, %s116
      %p130 = scmp.eq.s32.totalorder %s18, 3
      %p131 = por %p129, %p130
      %p133 = scmp.ne.s32.totalorder %s116, %s132
      %p134 = scmp.eq.s32.totalorder %s18, 0
      %p135 = por %p133, %p134
      %p136 = scmp.le.s32.totalorder 1, %s12
      %p137 = scmp.lt.s32.totalorder %s12, 5
      %p138 = pnand %p136, %p137
      %p139 = pneg %p138
      // Predicated region
      $region9: #{graphsage_recommender_forward.3} parent=5 // pred_check
        _
      $region10: #{graphsage_recommender_forward.3} parent=5 // pred_check_branch
        %141 = sbr.rel (%p138) target = $region12
      $region11: #{graphsage_recommender_forward.3} parent=5 // pred_region
        %s142 = ssub.s32 %s12, 1
      $region12: #{graphsage_recommender_forward.3} parent=5 // pred_fallthru
        _
      %p143 = scmp.lt.s32.totalorder %s12, 4
      // Predicated region
      $region13: #{graphsage_recommender_forward.3} parent=5 // pred_check
        %p144 = pneg %p143
      $region14: #{graphsage_recommender_forward.3} parent=5 // pred_check_branch
        %146 = sbr.rel (%p144) target = $region16
      $region15: #{graphsage_recommender_forward.3} parent=5 // pred_region
        // Predicated region
        $region17: #{graphsage_recommender_forward.3} parent=15 // pred_check
          %p147 = pneg %p44
        $region18: #{graphsage_recommender_forward.3} parent=15 // pred_check_branch
          %149 = sbr.rel (%p147) target = $region20
        $region19: #{graphsage_recommender_forward.3} parent=15 // pred_region
          %p150 = scmp.lt.s32.totalorder %s19, 1
          %s151 = scalar_select %p150, %s19, 1
          %s152 = scalar_lea.vmem %s0, %s151
        $region20: #{graphsage_recommender_forward.3} parent=15 // pred_fallthru
          _
        // Predicated region
        $region21: #{graphsage_recommender_forward.3} parent=15 // pred_check
          %p153 = pneg %p70
        $region22: #{graphsage_recommender_forward.3} parent=15 // pred_check_branch
          %155 = sbr.rel (%p153) target = $region24
        $region23: #{graphsage_recommender_forward.3} parent=15 // pred_region
          %p156 = scmp.lt.s32.totalorder %s19, 1
          %s157 = scalar_select %p156, %s19, 1
          %s158 = scalar_lea.vmem %s1, %s157
        $region24: #{graphsage_recommender_forward.3} parent=15 // pred_fallthru
          _
        // Predicated region
        $region25: #{graphsage_recommender_forward.3} parent=15 // pred_check
          %p159 = pneg %p96
        $region26: #{graphsage_recommender_forward.3} parent=15 // pred_check_branch
          %161 = sbr.rel (%p159) target = $region28
        $region27: #{graphsage_recommender_forward.3} parent=15 // pred_region
          %s162 = sand.u32 %s86, 1
          %s163 = sand.u32 %s86, 1
          %s164 = smul.addr %s163, 136
          %s165 = scalar_lea.vmem [#allocation3], %s164
          %s166 = smul.addr %s20, 8
          %s167 = scalar_lea.vmem %s2, %s166
          // Predicated region
          $region29: #{graphsage_recommender_forward.3} parent=27 // pred_check
            _
          $region30: #{graphsage_recommender_forward.3} parent=27 // pred_check_branch
            %169 = sbr.rel (0) target = $region32
          $region31: #{graphsage_recommender_forward.3} parent=27 // pred_region
            // Predicated region
            $region33: #{graphsage_recommender_forward.3} parent=31 // pred_check
              _
            $region34: #{graphsage_recommender_forward.3} parent=31 // pred_check_branch
              %171 = sbr.rel (0) target = $region36
            $region35: #{graphsage_recommender_forward.3} parent=31 // pred_region
              // Predicated region
              $region48: #{graphsage_recommender_forward.3} parent=35 // pred_check
                _
              $region49: #{graphsage_recommender_forward.3} parent=35 // pred_check_branch
                %219 = sbr.rel (0) target = $region51
              $region50: #{graphsage_recommender_forward.3} parent=35 // pred_region
                loop: start=0, step=1, limit=1
                $region52: #{graphsage_recommender_forward.3} parent=50 // loop_pre_header
                  _
                $region53: #{graphsage_recommender_forward.3} parent=50 // loop_header
                  %s221 = sphi 0, %s225
                  %p222 = scmp.ge.s32.totalorder %s221, 1
                  %s226 = sphi %s167, %s167
                  %s227 = sphi %s165, %s165
                $region54: #{graphsage_recommender_forward.3} parent=50 // loop_header_branch
                  %224 = sbr.rel (%p222) target = $region58
                $region55: #{graphsage_recommender_forward.3} parent=50 // loop_body
                  %v228 = vld [vmem:[%s226] sm:$0xff]
                  %229 = vst [vmem:[%s227] sm:$0xff] %v228
                  %v230 = vld [vmem:[%s226 + $0x10] sm:$0xff]
                  %231 = vst [vmem:[%s227 + $0x8] sm:$0xff] %v230
                  %v232 = vld [vmem:[%s226 + $0x20] sm:$0xff]
                  %233 = vst [vmem:[%s227 + $0x10] sm:$0xff] %v232
                  %v234 = vld [vmem:[%s226 + $0x30] sm:$0xff]
                  %235 = vst [vmem:[%s227 + $0x18] sm:$0xff] %v234
                  %v236 = vld [vmem:[%s226 + $0x40] sm:$0xff]
                  %237 = vst [vmem:[%s227 + $0x20] sm:$0xff] %v236
                  %v238 = vld [vmem:[%s226 + $0x50] sm:$0xff]
                  %239 = vst [vmem:[%s227 + $0x28] sm:$0xff] %v238
                  %v240 = vld [vmem:[%s226 + $0x60] sm:$0xff]
                  %241 = vst [vmem:[%s227 + $0x30] sm:$0xff] %v240
                  %v242 = vld [vmem:[%s226 + $0x70] sm:$0xff]
                  %243 = vst [vmem:[%s227 + $0x38] sm:$0xff] %v242
                  %v244 = vld [vmem:[%s226 + $0x80] sm:$0xff]
                  %245 = vst [vmem:[%s227 + $0x40] sm:$0xff] %v244
                  %v246 = vld [vmem:[%s226 + $0x90] sm:$0xff]
                  %247 = vst [vmem:[%s227 + $0x48] sm:$0xff] %v246
                  %v248 = vld [vmem:[%s226 + $0xa0] sm:$0xff]
                  %249 = vst [vmem:[%s227 + $0x50] sm:$0xff] %v248
                  %v250 = vld [vmem:[%s226 + $0xb0] sm:$0xff]
                  %251 = vst [vmem:[%s227 + $0x58] sm:$0xff] %v250
                  %v252 = vld [vmem:[%s226 + $0xc0] sm:$0xff]
                  %253 = vst [vmem:[%s227 + $0x60] sm:$0xff] %v252
                  %v254 = vld [vmem:[%s226 + $0xd0] sm:$0xff]
                  %255 = vst [vmem:[%s227 + $0x68] sm:$0xff] %v254
                  %v256 = vld [vmem:[%s226 + $0xe0] sm:$0xff]
                  %257 = vst [vmem:[%s227 + $0x70] sm:$0xff] %v256
                  %v258 = vld [vmem:[%s226 + $0xf0] sm:$0xff]
                  %259 = vst [vmem:[%s227 + $0x78] sm:$0xff] %v258
                  %v260 = vld [vmem:[%s226 + $0x100] sm:$0xff]
                  %261 = vst [vmem:[%s227 + $0x80] sm:$0xff] %v260
                $region56: #{graphsage_recommender_forward.3} parent=50 // loop_footer
                  %s225 = sadd.s32 1, %s221
                $region57: #{graphsage_recommender_forward.3} parent=50 // loop_footer_branch
                  %220 = sbr.rel target = $region53
                $region58: #{graphsage_recommender_forward.3} parent=50 // loop_exit
                  _
              $region51: #{graphsage_recommender_forward.3} parent=35 // pred_fallthru
                _
              // Predicated region
              $region59: #{graphsage_recommender_forward.3} parent=35 // pred_check
                _
              $region60: #{graphsage_recommender_forward.3} parent=35 // pred_check_branch
                %263 = sbr.rel target = $region62
              $region61: #{graphsage_recommender_forward.3} parent=35 // pred_region
                _
              $region62: #{graphsage_recommender_forward.3} parent=35 // pred_fallthru
                _
            $region36: #{graphsage_recommender_forward.3} parent=31 // pred_fallthru
              _
            // Predicated region
            $region37: #{graphsage_recommender_forward.3} parent=31 // pred_check
              _
            $region38: #{graphsage_recommender_forward.3} parent=31 // pred_check_branch
              %173 = sbr.rel target = $region40
            $region39: #{graphsage_recommender_forward.3} parent=31 // pred_region
              %s175 = ssub.s32 256, 1
              loop: start=0, step=1, limit=1
              $region41: #{graphsage_recommender_forward.3} parent=39 // loop_pre_header
                _
              $region42: #{graphsage_recommender_forward.3} parent=39 // loop_header
                %s177 = sphi 0, %s181
                %p178 = scmp.ge.s32.totalorder %s177, 1
                %s182 = sphi %s167, %s167
                %s183 = sphi %s165, %s165
              $region43: #{graphsage_recommender_forward.3} parent=39 // loop_header_branch
                %180 = sbr.rel (%p178) target = $region47
              $region44: #{graphsage_recommender_forward.3} parent=39 // loop_body
                %v184 = vld [vmem:[%s182] sm:%s175]
                %185 = vst [vmem:[%s183] sm:%s175] %v184
                %v186 = vld [vmem:[%s182 + $0x10] sm:%s175]
                %187 = vst [vmem:[%s183 + $0x8] sm:%s175] %v186
                %v188 = vld [vmem:[%s182 + $0x20] sm:%s175]
                %189 = vst [vmem:[%s183 + $0x10] sm:%s175] %v188
                %v190 = vld [vmem:[%s182 + $0x30] sm:%s175]
                %191 = vst [vmem:[%s183 + $0x18] sm:%s175] %v190
                %v192 = vld [vmem:[%s182 + $0x40] sm:%s175]
                %193 = vst [vmem:[%s183 + $0x20] sm:%s175] %v192
                %v194 = vld [vmem:[%s182 + $0x50] sm:%s175]
                %195 = vst [vmem:[%s183 + $0x28] sm:%s175] %v194
                %v196 = vld [vmem:[%s182 + $0x60] sm:%s175]
                %197 = vst [vmem:[%s183 + $0x30] sm:%s175] %v196
                %v198 = vld [vmem:[%s182 + $0x70] sm:%s175]
                %199 = vst [vmem:[%s183 + $0x38] sm:%s175] %v198
                %v200 = vld [vmem:[%s182 + $0x80] sm:%s175]
                %201 = vst [vmem:[%s183 + $0x40] sm:%s175] %v200
                %v202 = vld [vmem:[%s182 + $0x90] sm:%s175]
                %203 = vst [vmem:[%s183 + $0x48] sm:%s175] %v202
                %v204 = vld [vmem:[%s182 + $0xa0] sm:%s175]
                %205 = vst [vmem:[%s183 + $0x50] sm:%s175] %v204
                %v206 = vld [vmem:[%s182 + $0xb0] sm:%s175]
                %207 = vst [vmem:[%s183 + $0x58] sm:%s175] %v206
                %v208 = vld [vmem:[%s182 + $0xc0] sm:%s175]
                %209 = vst [vmem:[%s183 + $0x60] sm:%s175] %v208
                %v210 = vld [vmem:[%s182 + $0xd0] sm:%s175]
                %211 = vst [vmem:[%s183 + $0x68] sm:%s175] %v210
                %v212 = vld [vmem:[%s182 + $0xe0] sm:%s175]
                %213 = vst [vmem:[%s183 + $0x70] sm:%s175] %v212
                %v214 = vld [vmem:[%s182 + $0xf0] sm:%s175]
                %215 = vst [vmem:[%s183 + $0x78] sm:%s175] %v214
                %v216 = vld [vmem:[%s182 + $0x100] sm:%s175]
                %217 = vst [vmem:[%s183 + $0x80] sm:%s175] %v216
              $region45: #{graphsage_recommender_forward.3} parent=39 // loop_footer
                %s181 = sadd.s32 1, %s177
              $region46: #{graphsage_recommender_forward.3} parent=39 // loop_footer_branch
                %176 = sbr.rel target = $region42
              $region47: #{graphsage_recommender_forward.3} parent=39 // loop_exit
                _
            $region40: #{graphsage_recommender_forward.3} parent=31 // pred_fallthru
              _
          $region32: #{graphsage_recommender_forward.3} parent=27 // pred_fallthru
            _
          %264 = vnop
        $region28: #{graphsage_recommender_forward.3} parent=15 // pred_fallthru
          _
      $region16: #{graphsage_recommender_forward.3} parent=5 // pred_fallthru
        _
      %p265 = scmp.le.s32.totalorder 1, %s12
      %p266 = scmp.lt.s32.totalorder %s12, 5
      %p267 = pnand %p265, %p266
      %p268 = pneg %p267
      // Predicated region
      $region63: #{graphsage_recommender_forward.3} parent=5 // pred_check
        _
      $region64: #{graphsage_recommender_forward.3} parent=5 // pred_check_branch
        %270 = sbr.rel (%p267) target = $region66
      $region65: #{graphsage_recommender_forward.3} parent=5 // pred_region
        %s271 = ssub.s32 %s12, 1
        %s272 = sand.u32 %s89, 1
        %s273 = sand.u32 %s89, 1
        %s274 = smul.addr %s273, 136
        %s275 = scalar_lea.vmem [#allocation3], %s274
        // Predicated region
        $region67: #{graphsage_recommender_forward.3} parent=65 // pred_check
          %p276 = pneg %p102
        $region68: #{graphsage_recommender_forward.3} parent=65 // pred_check_branch
          %278 = sbr.rel (%p276) target = $region70
        $region69: #{graphsage_recommender_forward.3} parent=65 // pred_region
          _
        $region70: #{graphsage_recommender_forward.3} parent=65 // pred_fallthru
          _
        %p279 = scmp.lt.s32.totalorder %s21, 1
        %s280 = scalar_select %p279, %s21, 1
        %s281 = scalar_lea.vmem %s0, %s280
        %p282 = pneg %p50
        %p283 = pneg %p47
        %p284 = scmp.lt.s32.totalorder %s21, 1
        %s285 = scalar_select %p284, %s21, 1
        %s286 = scalar_lea.vmem %s1, %s285
        %p287 = pneg %p76
        %p288 = pneg %p73
        %s289 = sand.u32 %s89, 1
        %s290 = sand.u32 %s89, 1
        %s291 = smul.addr %s290, 136
        %s292 = scalar_lea.vmem [#allocation3], %s291
        %p293 = pneg %p102
        %p294 = pneg %p99
        %p295 = pneg %p128
        %p296 = pneg %p125
        %s297 = sand.u32 %s115, 1
        %s298 = scalar_lea.sflag [#allocation5], %s297
        %s299 = sand.u32 %s115, 1
        %s300 = scalar_lea.vmem [#allocation4], %s299
        %p301 = scmp.lt.s32.totalorder %s21, 1
        %s302 = scalar_select %p301, %s21, 1
        %s303 = scalar_lea.vmem %s0, %s302
        %p304 = scmp.lt.s32.totalorder %s21, 1
        %s305 = scalar_select %p304, %s21, 1
        %s306 = scalar_lea.vmem %s1, %s305
        %p307 = scmp.eq.s32.totalorder %s22, 0
        // Predicated region
        $region71: #{graphsage_recommender_forward.3} parent=65 // pred_check
          %p308 = pneg %p307
        $region72: #{graphsage_recommender_forward.3} parent=65 // pred_check_branch
          %310 = sbr.rel (%p308) target = $region74
        $region73: #{graphsage_recommender_forward.3} parent=65 // pred_region
          %311 = vst [vmem:[#allocation2] sm:$0xff] 0.0
          %312 = vst [vmem:[#allocation2 + $0x8] sm:$0xff] 0.0
          %313 = vst [vmem:[#allocation2 + $0x10] sm:$0xff] 0.0
          %314 = vst [vmem:[#allocation2 + $0x18] sm:$0xff] 0.0
          %315 = vst [vmem:[#allocation2 + $0x20] sm:$0xff] 0.0
          %316 = vst [vmem:[#allocation2 + $0x28] sm:$0xff] 0.0
          %317 = vst [vmem:[#allocation2 + $0x30] sm:$0xff] 0.0
          %318 = vst [vmem:[#allocation2 + $0x38] sm:$0xff] 0.0
          %319 = vst [vmem:[#allocation2 + $0x40] sm:$0xff] 0.0
          %320 = vst [vmem:[#allocation2 + $0x48] sm:$0xff] 0.0
          %321 = vst [vmem:[#allocation2 + $0x50] sm:$0xff] 0.0
          %322 = vst [vmem:[#allocation2 + $0x58] sm:$0xff] 0.0
          %323 = vst [vmem:[#allocation2 + $0x60] sm:$0xff] 0.0
          %324 = vst [vmem:[#allocation2 + $0x68] sm:$0xff] 0.0
          %325 = vst [vmem:[#allocation2 + $0x70] sm:$0xff] 0.0
          %326 = vst [vmem:[#allocation2 + $0x78] sm:$0xff] 0.0
          %327 = vst [vmem:[#allocation2 + $0x80] sm:$0xff] 0.0
          %328 = vst [vmem:[#allocation2 + $0x88] sm:$0xff] 0.0
          %329 = vst [vmem:[#allocation2 + $0x90] sm:$0xff] 0.0
          %330 = vst [vmem:[#allocation2 + $0x98] sm:$0xff] 0.0
          %331 = vst [vmem:[#allocation2 + $0xa0] sm:$0xff] 0.0
          %332 = vst [vmem:[#allocation2 + $0xa8] sm:$0xff] 0.0
          %333 = vst [vmem:[#allocation2 + $0xb0] sm:$0xff] 0.0
          %334 = vst [vmem:[#allocation2 + $0xb8] sm:$0xff] 0.0
          %335 = vst [vmem:[#allocation2 + $0xc0] sm:$0xff] 0.0
          %336 = vst [vmem:[#allocation2 + $0xc8] sm:$0xff] 0.0
          %337 = vst [vmem:[#allocation2 + $0xd0] sm:$0xff] 0.0
          %338 = vst [vmem:[#allocation2 + $0xd8] sm:$0xff] 0.0
          %339 = vst [vmem:[#allocation2 + $0xe0] sm:$0xff] 0.0
          %340 = vst [vmem:[#allocation2 + $0xe8] sm:$0xff] 0.0
          %341 = vst [vmem:[#allocation2 + $0xf0] sm:$0xff] 0.0
          %342 = vst [vmem:[#allocation2 + $0xf8] sm:$0xff] 0.0
          %343 = vst [vmem:[#allocation2 + $0x100] sm:$0x1] 0.0
          %344 = vst [vmem:[#allocation2 + $0x108] sm:$0x1] 0.0
        $region74: #{graphsage_recommender_forward.3} parent=65 // pred_fallthru
          _
        %s345 = smul.u32 %s22, 128
        %v346 = vld [vmem:[%s303] sm:$0x1]
        %v347 = vld [vmem:[%s306] sm:$0x1]
        %v348 = vlaneseq
        %v349 = vshrl.u32 %v348, 7
        %v350 = vadd.s32 %v349, 8
        %v351 = vadd.s32 %v349, 16
        %v352 = vadd.s32 %v349, 24
        %v353 = vadd.s32 %v349, 32
        %v354 = vadd.s32 %v349, 40
        %v355 = vadd.s32 %v349, 48
        %v356 = vadd.s32 %v349, 56
        %v357 = vadd.s32 %v349, 64
        %v358 = vadd.s32 %v349, 72
        %v359 = vadd.s32 %v349, 80
        %v360 = vadd.s32 %v349, 88
        %v361 = vadd.s32 %v349, 96
        %v362 = vadd.s32 %v349, 104
        %v363 = vadd.s32 %v349, 112
        %v364 = vadd.s32 %v349, 120
        %v365 = vstv %s345
        %v366 = vadd.s32 %v349, %v365
        %v367 = vadd.s32 %v350, %v365
        %v368 = vadd.s32 %v351, %v365
        %v369 = vadd.s32 %v352, %v365
        %v370 = vadd.s32 %v353, %v365
        %v371 = vadd.s32 %v354, %v365
        %v372 = vadd.s32 %v355, %v365
        %v373 = vadd.s32 %v356, %v365
        %v374 = vadd.s32 %v357, %v365
        %v375 = vadd.s32 %v358, %v365
        %v376 = vadd.s32 %v359, %v365
        %v377 = vadd.s32 %v360, %v365
        %v378 = vadd.s32 %v361, %v365
        %v379 = vadd.s32 %v362, %v365
        %v380 = vadd.s32 %v363, %v365
        %v381 = vadd.s32 %v364, %v365
        %v382 = vlaneseq
        %v383 = vshrl.u32 %v382, 7
        %v384 = vsub.s32 0, %v383
        %v385 = vrot.slane %v346, %v384
        %v386 = vlaneseq
        %v387 = vshrl.u32 %v386, 7
        %v388 = vsub.s32 0, %v387
        %v389 = vrot.slane %v347, %v388
        %vm390 = vcmp.eq.s32.totalorder %v366, %v385
        %vm391 = vcmp.eq.s32.totalorder %v366, %v389
        %vm392 = vcmp.eq.s32.totalorder %v367, %v385
        %vm393 = vcmp.eq.s32.totalorder %v367, %v389
        %vm394 = vcmp.eq.s32.totalorder %v368, %v385
        %vm395 = vcmp.eq.s32.totalorder %v368, %v389
        %vm396 = vcmp.eq.s32.totalorder %v369, %v385
        %vm397 = vcmp.eq.s32.totalorder %v369, %v389
        %vm398 = vcmp.eq.s32.totalorder %v370, %v385
        %vm399 = vcmp.eq.s32.totalorder %v370, %v389
        %vm400 = vcmp.eq.s32.totalorder %v371, %v385
        %vm401 = vcmp.eq.s32.totalorder %v371, %v389
        %vm402 = vcmp.eq.s32.totalorder %v372, %v385
        %vm403 = vcmp.eq.s32.totalorder %v372, %v389
        %vm404 = vcmp.eq.s32.totalorder %v373, %v385
        %vm405 = vcmp.eq.s32.totalorder %v373, %v389
        %vm406 = vcmp.eq.s32.totalorder %v374, %v385
        %vm407 = vcmp.eq.s32.totalorder %v374, %v389
        %vm408 = vcmp.eq.s32.totalorder %v375, %v385
        %vm409 = vcmp.eq.s32.totalorder %v375, %v389
        %vm410 = vcmp.eq.s32.totalorder %v376, %v385
        %vm411 = vcmp.eq.s32.totalorder %v376, %v389
        %vm412 = vcmp.eq.s32.totalorder %v377, %v385
        %vm413 = vcmp.eq.s32.totalorder %v377, %v389
        %vm414 = vcmp.eq.s32.totalorder %v378, %v385
        %vm415 = vcmp.eq.s32.totalorder %v378, %v389
        %vm416 = vcmp.eq.s32.totalorder %v379, %v385
        %vm417 = vcmp.eq.s32.totalorder %v379, %v389
        %vm418 = vcmp.eq.s32.totalorder %v380, %v385
        %vm419 = vcmp.eq.s32.totalorder %v380, %v389
        %vm420 = vcmp.eq.s32.totalorder %v381, %v385
        %vm421 = vcmp.eq.s32.totalorder %v381, %v389
        %v422 = vsel %vm390, 1, 0
        %v423 = vsel %vm391, 1, 0
        %v424 = vsel %vm392, 1, 0
        %v425 = vsel %vm393, 1, 0
        %v426 = vsel %vm394, 1, 0
        %v427 = vsel %vm395, 1, 0
        %v428 = vsel %vm396, 1, 0
        %v429 = vsel %vm397, 1, 0
        %v430 = vsel %vm398, 1, 0
        %v431 = vsel %vm399, 1, 0
        %v432 = vsel %vm400, 1, 0
        %v433 = vsel %vm401, 1, 0
        %v434 = vsel %vm402, 1, 0
        %v435 = vsel %vm403, 1, 0
        %v436 = vsel %vm404, 1, 0
        %v437 = vsel %vm405, 1, 0
        %v438 = vsel %vm406, 1, 0
        %v439 = vsel %vm407, 1, 0
        %v440 = vsel %vm408, 1, 0
        %v441 = vsel %vm409, 1, 0
        %v442 = vsel %vm410, 1, 0
        %v443 = vsel %vm411, 1, 0
        %v444 = vsel %vm412, 1, 0
        %v445 = vsel %vm413, 1, 0
        %v446 = vsel %vm414, 1, 0
        %v447 = vsel %vm415, 1, 0
        %v448 = vsel %vm416, 1, 0
        %v449 = vsel %vm417, 1, 0
        %v450 = vsel %vm418, 1, 0
        %v451 = vsel %vm419, 1, 0
        %v452 = vsel %vm420, 1, 0
        %v453 = vsel %vm421, 1, 0
        %v454 = vcvt.s32.f32 %v422
        %v455 = vcvt.s32.f32 %v423
        %v456 = vcvt.s32.f32 %v424
        %v457 = vcvt.s32.f32 %v425
        %v458 = vcvt.s32.f32 %v426
        %v459 = vcvt.s32.f32 %v427
        %v460 = vcvt.s32.f32 %v428
        %v461 = vcvt.s32.f32 %v429
        %v462 = vcvt.s32.f32 %v430
        %v463 = vcvt.s32.f32 %v431
        %v464 = vcvt.s32.f32 %v432
        %v465 = vcvt.s32.f32 %v433
        %v466 = vcvt.s32.f32 %v434
        %v467 = vcvt.s32.f32 %v435
        %v468 = vcvt.s32.f32 %v436
        %v469 = vcvt.s32.f32 %v437
        %v470 = vcvt.s32.f32 %v438
        %v471 = vcvt.s32.f32 %v439
        %v472 = vcvt.s32.f32 %v440
        %v473 = vcvt.s32.f32 %v441
        %v474 = vcvt.s32.f32 %v442
        %v475 = vcvt.s32.f32 %v443
        %v476 = vcvt.s32.f32 %v444
        %v477 = vcvt.s32.f32 %v445
        %v478 = vcvt.s32.f32 %v446
        %v479 = vcvt.s32.f32 %v447
        %v480 = vcvt.s32.f32 %v448
        %v481 = vcvt.s32.f32 %v449
        %v482 = vcvt.s32.f32 %v450
        %v483 = vcvt.s32.f32 %v451
        %v484 = vcvt.s32.f32 %v452
        %v485 = vcvt.s32.f32 %v453
        %v486 = vld [vmem:[#allocation2] sm:$0xff]
        %v487 = vld [vmem:[#allocation2 + $0x8] sm:$0xff]
        %v488 = vld [vmem:[#allocation2 + $0x10] sm:$0xff]
        %v489 = vld [vmem:[#allocation2 + $0x18] sm:$0xff]
        %v490 = vld [vmem:[#allocation2 + $0x20] sm:$0xff]
        %v491 = vld [vmem:[#allocation2 + $0x28] sm:$0xff]
        %v492 = vld [vmem:[#allocation2 + $0x30] sm:$0xff]
        %v493 = vld [vmem:[#allocation2 + $0x38] sm:$0xff]
        %v494 = vld [vmem:[#allocation2 + $0x40] sm:$0xff]
        %v495 = vld [vmem:[#allocation2 + $0x48] sm:$0xff]
        %v496 = vld [vmem:[#allocation2 + $0x50] sm:$0xff]
        %v497 = vld [vmem:[#allocation2 + $0x58] sm:$0xff]
        %v498 = vld [vmem:[#allocation2 + $0x60] sm:$0xff]
        %v499 = vld [vmem:[#allocation2 + $0x68] sm:$0xff]
        %v500 = vld [vmem:[#allocation2 + $0x70] sm:$0xff]
        %v501 = vld [vmem:[#allocation2 + $0x78] sm:$0xff]
        %v502 = vld [vmem:[#allocation2 + $0x80] sm:$0xff]
        %v503 = vld [vmem:[#allocation2 + $0x88] sm:$0xff]
        %v504 = vld [vmem:[#allocation2 + $0x90] sm:$0xff]
        %v505 = vld [vmem:[#allocation2 + $0x98] sm:$0xff]
        %v506 = vld [vmem:[#allocation2 + $0xa0] sm:$0xff]
        %v507 = vld [vmem:[#allocation2 + $0xa8] sm:$0xff]
        %v508 = vld [vmem:[#allocation2 + $0xb0] sm:$0xff]
        %v509 = vld [vmem:[#allocation2 + $0xb8] sm:$0xff]
        %v510 = vld [vmem:[#allocation2 + $0xc0] sm:$0xff]
        %v511 = vld [vmem:[#allocation2 + $0xc8] sm:$0xff]
        %v512 = vld [vmem:[#allocation2 + $0xd0] sm:$0xff]
        %v513 = vld [vmem:[#allocation2 + $0xd8] sm:$0xff]
        %v514 = vld [vmem:[#allocation2 + $0xe0] sm:$0xff]
        %v515 = vld [vmem:[#allocation2 + $0xe8] sm:$0xff]
        %v516 = vld [vmem:[#allocation2 + $0xf0] sm:$0xff]
        %v517 = vld [vmem:[#allocation2 + $0xf8] sm:$0xff]
        %v518 = vld [vmem:[#allocation2 + $0x100] sm:$0x1]
        %v519 = vld [vmem:[#allocation2 + $0x108] sm:$0x1]
        %v520 = vld [vmem:[%s275] sm:$0xff]
        %v521 = vld [vmem:[%s275 + $0x8] sm:$0xff]
        %v522 = vld [vmem:[%s275 + $0x10] sm:$0xff]
        %v523 = vld [vmem:[%s275 + $0x18] sm:$0xff]
        %v524 = vld [vmem:[%s275 + $0x20] sm:$0xff]
        %v525 = vld [vmem:[%s275 + $0x28] sm:$0xff]
        %v526 = vld [vmem:[%s275 + $0x30] sm:$0xff]
        %v527 = vld [vmem:[%s275 + $0x38] sm:$0xff]
        %v528 = vld [vmem:[%s275 + $0x40] sm:$0xff]
        %v529 = vld [vmem:[%s275 + $0x48] sm:$0xff]
        %v530 = vld [vmem:[%s275 + $0x50] sm:$0xff]
        %v531 = vld [vmem:[%s275 + $0x58] sm:$0xff]
        %v532 = vld [vmem:[%s275 + $0x60] sm:$0xff]
        %v533 = vld [vmem:[%s275 + $0x68] sm:$0xff]
        %v534 = vld [vmem:[%s275 + $0x70] sm:$0xff]
        %v535 = vld [vmem:[%s275 + $0x78] sm:$0xff]
        %v536 = vld [vmem:[%s275 + $0x80] sm:$0x1]
        %537 = vmatprep.subr.mxu0 %v485
        %538 = vmatpush1.msra.mxu0 %v484
        %539 = vmatprep.subr.mxu0 %v483
        %540 = vmatpush1.msra.mxu0 %v482
        %541 = vmatprep.subr.mxu0 %v481
        %542 = vmatpush1.msra.mxu0 %v480
        %543 = vmatprep.subr.mxu0 %v479
        %544 = vmatpush1.msra.mxu0 %v478
        %545 = vmatprep.subr.mxu0 %v477
        %546 = vmatpush1.msra.mxu0 %v476
        %547 = vmatprep.subr.mxu0 %v475
        %548 = vmatpush1.msra.mxu0 %v474
        %549 = vmatprep.subr.mxu0 %v473
        %550 = vmatpush1.msra.mxu0 %v472
        %551 = vmatprep.subr.mxu0 %v471
        %552 = vmatpush1.msra.mxu0 %v470
        %553 = vmatprep.subr.mxu0 %v469
        %554 = vmatpush1.msra.mxu0 %v468
        %555 = vmatprep.subr.mxu0 %v467
        %556 = vmatpush1.msra.mxu0 %v466
        %557 = vmatprep.subr.mxu0 %v465
        %558 = vmatpush1.msra.mxu0 %v464
        %559 = vmatprep.subr.mxu0 %v463
        %560 = vmatpush1.msra.mxu0 %v462
        %561 = vmatprep.subr.mxu0 %v461
        %562 = vmatpush1.msra.mxu0 %v460
        %563 = vmatprep.subr.mxu0 %v459
        %564 = vmatpush1.msra.mxu0 %v458
        %565 = vmatprep.subr.mxu0 %v457
        %566 = vmatpush1.msra.mxu0 %v456
        %567 = vmatprep.subr.mxu0 %v455
        %568 = vmatpush1.msra.mxu0 %v454
        %569 = vmatprep.subr.mxu0 0.0
        %570 = vmatpush2.msra.mxu0 0.0
        %571 = vmatprep.subr.mxu0 0.0
        %572 = vmatpush2.msra.mxu0 0.0
        %573 = vmatprep.subr.mxu0 0.0
        %574 = vmatpush2.msra.mxu0 0.0
        %575 = vmatprep.subr.mxu0 0.0
        %576 = vmatpush2.msra.mxu0 0.0
        %577 = vmatprep.subr.mxu0 0.0
        %578 = vmatpush2.msra.mxu0 0.0
        %579 = vmatprep.subr.mxu0 0.0
        %580 = vmatpush2.msra.mxu0 0.0
        %581 = vmatprep.subr.mxu0 0.0
        %582 = vmatpush2.msra.mxu0 0.0
        %583 = vmatprep.subr.mxu0 0.0
        %584 = vmatpush2.msra.mxu0 0.0
        %585 = vmatprep.subr.mxu0 0.0
        %586 = vmatpush2.msra.mxu0 0.0
        %587 = vmatprep.subr.mxu0 0.0
        %588 = vmatpush2.msra.mxu0 0.0
        %589 = vmatprep.subr.mxu0 0.0
        %590 = vmatpush2.msra.mxu0 0.0
        %591 = vmatprep.subr.mxu0 0.0
        %592 = vmatpush2.msra.mxu0 0.0
        %593 = vmatprep.subr.mxu0 0.0
        %594 = vmatpush2.msra.mxu0 0.0
        %595 = vmatprep.subr.mxu0 0.0
        %596 = vmatpush2.msra.mxu0 0.0
        %597 = vmatprep.subr.mxu0 0.0
        %598 = vmatpush2.msra.mxu0 0.0
        %599 = vmatprep.subr.mxu0 0.0
        %600 = vmatpush2.msra.mxu0 0.0
        %601 = vmatprep.mubr.f32.mxu0 0.0
        %602 = vmatmul.mubr.f32.gmra.mxu0 %v520
        %v603 = vpop.f32.mrf.mxu0
        %v604 = vadd.f32 0.0, %v603
        %v605 = vpop.f32.mrf.mxu0
        %v606 = vadd.f32 0.0, %v605
        %607 = vmatprep.mubr.f32.mxu0 0.0
        %608 = vmatmul.mubr.f32.gmra.mxu0 %v521
        %v609 = vpop.f32.mrf.mxu0
        %v610 = vadd.f32 0.0, %v609
        %v611 = vpop.f32.mrf.mxu0
        %v612 = vadd.f32 0.0, %v611
        %613 = vmatprep.mubr.f32.mxu0 0.0
        %614 = vmatmul.mubr.f32.gmra.mxu0 %v522
        %v615 = vpop.f32.mrf.mxu0
        %v616 = vadd.f32 0.0, %v615
        %v617 = vpop.f32.mrf.mxu0
        %v618 = vadd.f32 0.0, %v617
        %619 = vmatprep.mubr.f32.mxu0 0.0
        %620 = vmatmul.mubr.f32.gmra.mxu0 %v523
        %v621 = vpop.f32.mrf.mxu0
        %v622 = vadd.f32 0.0, %v621
        %v623 = vpop.f32.mrf.mxu0
        %v624 = vadd.f32 0.0, %v623
        %625 = vmatprep.mubr.f32.mxu0 0.0
        %626 = vmatmul.mubr.f32.gmra.mxu0 %v524
        %v627 = vpop.f32.mrf.mxu0
        %v628 = vadd.f32 0.0, %v627
        %v629 = vpop.f32.mrf.mxu0
        %v630 = vadd.f32 0.0, %v629
        %631 = vmatprep.mubr.f32.mxu0 0.0
        %632 = vmatmul.mubr.f32.gmra.mxu0 %v525
        %v633 = vpop.f32.mrf.mxu0
        %v634 = vadd.f32 0.0, %v633
        %v635 = vpop.f32.mrf.mxu0
        %v636 = vadd.f32 0.0, %v635
        %637 = vmatprep.mubr.f32.mxu0 0.0
        %638 = vmatmul.mubr.f32.gmra.mxu0 %v526
        %v639 = vpop.f32.mrf.mxu0
        %v640 = vadd.f32 0.0, %v639
        %v641 = vpop.f32.mrf.mxu0
        %v642 = vadd.f32 0.0, %v641
        %643 = vmatprep.mubr.f32.mxu0 0.0
        %644 = vmatmul.mubr.f32.gmra.mxu0 %v527
        %v645 = vpop.f32.mrf.mxu0
        %v646 = vadd.f32 0.0, %v645
        %v647 = vpop.f32.mrf.mxu0
        %v648 = vadd.f32 0.0, %v647
        %649 = vmatprep.mubr.f32.mxu0 0.0
        %650 = vmatmul.mubr.f32.gmra.mxu0 %v528
        %v651 = vpop.f32.mrf.mxu0
        %v652 = vadd.f32 0.0, %v651
        %v653 = vpop.f32.mrf.mxu0
        %v654 = vadd.f32 0.0, %v653
        %655 = vmatprep.mubr.f32.mxu0 0.0
        %656 = vmatmul.mubr.f32.gmra.mxu0 %v529
        %v657 = vpop.f32.mrf.mxu0
        %v658 = vadd.f32 0.0, %v657
        %v659 = vpop.f32.mrf.mxu0
        %v660 = vadd.f32 0.0, %v659
        %661 = vmatprep.mubr.f32.mxu0 0.0
        %662 = vmatmul.mubr.f32.gmra.mxu0 %v530
        %v663 = vpop.f32.mrf.mxu0
        %v664 = vadd.f32 0.0, %v663
        %v665 = vpop.f32.mrf.mxu0
        %v666 = vadd.f32 0.0, %v665
        %667 = vmatprep.mubr.f32.mxu0 0.0
        %668 = vmatmul.mubr.f32.gmra.mxu0 %v531
        %v669 = vpop.f32.mrf.mxu0
        %v670 = vadd.f32 0.0, %v669
        %v671 = vpop.f32.mrf.mxu0
        %v672 = vadd.f32 0.0, %v671
        %673 = vmatprep.mubr.f32.mxu0 0.0
        %674 = vmatmul.mubr.f32.gmra.mxu0 %v532
        %v675 = vpop.f32.mrf.mxu0
        %v676 = vadd.f32 0.0, %v675
        %v677 = vpop.f32.mrf.mxu0
        %v678 = vadd.f32 0.0, %v677
        %679 = vmatprep.mubr.f32.mxu0 0.0
        %680 = vmatmul.mubr.f32.gmra.mxu0 %v533
        %v681 = vpop.f32.mrf.mxu0
        %v682 = vadd.f32 0.0, %v681
        %v683 = vpop.f32.mrf.mxu0
        %v684 = vadd.f32 0.0, %v683
        %685 = vmatprep.mubr.f32.mxu0 0.0
        %686 = vmatmul.mubr.f32.gmra.mxu0 %v534
        %v687 = vpop.f32.mrf.mxu0
        %v688 = vadd.f32 0.0, %v687
        %v689 = vpop.f32.mrf.mxu0
        %v690 = vadd.f32 0.0, %v689
        %691 = vmatprep.mubr.f32.mxu0 0.0
        %692 = vmatmul.mubr.f32.gmra.mxu0 %v535
        %v693 = vpop.f32.mrf.mxu0
        %v694 = vadd.f32 0.0, %v693
        %v695 = vpop.f32.mrf.mxu0
        %v696 = vadd.f32 0.0, %v695
        %697 = vmatprep.mubr.f32.mxu0 0.0
        %698 = vmatmul.mubr.f32.gmra.mxu0 %v536
        %v699 = vpop.f32.mrf.mxu0
        %v700 = vadd.f32 0.0, %v699
        %v701 = vpop.f32.mrf.mxu0
        %v702 = vadd.f32 0.0, %v701
        %703 = vdwg.mxu0
        %v704 = vadd.f32 %v486, %v604
        %v705 = vadd.f32 %v487, %v606
        %v706 = vadd.f32 %v488, %v610
        %v707 = vadd.f32 %v489, %v612
        %v708 = vadd.f32 %v490, %v616
        %v709 = vadd.f32 %v491, %v618
        %v710 = vadd.f32 %v492, %v622
        %v711 = vadd.f32 %v493, %v624
        %v712 = vadd.f32 %v494, %v628
        %v713 = vadd.f32 %v495, %v630
        %v714 = vadd.f32 %v496, %v634
        %v715 = vadd.f32 %v497, %v636
        %v716 = vadd.f32 %v498, %v640
        %v717 = vadd.f32 %v499, %v642
        %v718 = vadd.f32 %v500, %v646
        %v719 = vadd.f32 %v501, %v648
        %v720 = vadd.f32 %v502, %v652
        %v721 = vadd.f32 %v503, %v654
        %v722 = vadd.f32 %v504, %v658
        %v723 = vadd.f32 %v505, %v660
        %v724 = vadd.f32 %v506, %v664
        %v725 = vadd.f32 %v507, %v666
        %v726 = vadd.f32 %v508, %v670
        %v727 = vadd.f32 %v509, %v672
        %v728 = vadd.f32 %v510, %v676
        %v729 = vadd.f32 %v511, %v678
        %v730 = vadd.f32 %v512, %v682
        %v731 = vadd.f32 %v513, %v684
        %v732 = vadd.f32 %v514, %v688
        %v733 = vadd.f32 %v515, %v690
        %v734 = vadd.f32 %v516, %v694
        %v735 = vadd.f32 %v517, %v696
        %v736 = vadd.f32 %v518, %v700
        %v737 = vadd.f32 %v519, %v702
        %738 = vst [vmem:[#allocation2] sm:$0xff] %v704
        %739 = vst [vmem:[#allocation2 + $0x8] sm:$0xff] %v705
        %740 = vst [vmem:[#allocation2 + $0x10] sm:$0xff] %v706
        %741 = vst [vmem:[#allocation2 + $0x18] sm:$0xff] %v707
        %742 = vst [vmem:[#allocation2 + $0x20] sm:$0xff] %v708
        %743 = vst [vmem:[#allocation2 + $0x28] sm:$0xff] %v709
        %744 = vst [vmem:[#allocation2 + $0x30] sm:$0xff] %v710
        %745 = vst [vmem:[#allocation2 + $0x38] sm:$0xff] %v711
        %746 = vst [vmem:[#allocation2 + $0x40] sm:$0xff] %v712
        %747 = vst [vmem:[#allocation2 + $0x48] sm:$0xff] %v713
        %748 = vst [vmem:[#allocation2 + $0x50] sm:$0xff] %v714
        %749 = vst [vmem:[#allocation2 + $0x58] sm:$0xff] %v715
        %750 = vst [vmem:[#allocation2 + $0x60] sm:$0xff] %v716
        %751 = vst [vmem:[#allocation2 + $0x68] sm:$0xff] %v717
        %752 = vst [vmem:[#allocation2 + $0x70] sm:$0xff] %v718
        %753 = vst [vmem:[#allocation2 + $0x78] sm:$0xff] %v719
        %754 = vst [vmem:[#allocation2 + $0x80] sm:$0xff] %v720
        %755 = vst [vmem:[#allocation2 + $0x88] sm:$0xff] %v721
        %756 = vst [vmem:[#allocation2 + $0x90] sm:$0xff] %v722
        %757 = vst [vmem:[#allocation2 + $0x98] sm:$0xff] %v723
        %758 = vst [vmem:[#allocation2 + $0xa0] sm:$0xff] %v724
        %759 = vst [vmem:[#allocation2 + $0xa8] sm:$0xff] %v725
        %760 = vst [vmem:[#allocation2 + $0xb0] sm:$0xff] %v726
        %761 = vst [vmem:[#allocation2 + $0xb8] sm:$0xff] %v727
        %762 = vst [vmem:[#allocation2 + $0xc0] sm:$0xff] %v728
        %763 = vst [vmem:[#allocation2 + $0xc8] sm:$0xff] %v729
        %764 = vst [vmem:[#allocation2 + $0xd0] sm:$0xff] %v730
        %765 = vst [vmem:[#allocation2 + $0xd8] sm:$0xff] %v731
        %766 = vst [vmem:[#allocation2 + $0xe0] sm:$0xff] %v732
        %767 = vst [vmem:[#allocation2 + $0xe8] sm:$0xff] %v733
        %768 = vst [vmem:[#allocation2 + $0xf0] sm:$0xff] %v734
        %769 = vst [vmem:[#allocation2 + $0xf8] sm:$0xff] %v735
        %770 = vst [vmem:[#allocation2 + $0x100] sm:$0x1] %v736
        %771 = vst [vmem:[#allocation2 + $0x108] sm:$0x1] %v737
        %p772 = scmp.eq.s32.totalorder %s22, 1
        // Predicated region
        $region75: #{graphsage_recommender_forward.3} parent=65 // pred_check
          %p773 = pneg %p772
        $region76: #{graphsage_recommender_forward.3} parent=65 // pred_check_branch
          %775 = sbr.rel (%p773) target = $region78
        $region77: #{graphsage_recommender_forward.3} parent=65 // pred_region
          %v776 = vld [vmem:[#allocation2] sm:$0xff]
          %v777 = vld [vmem:[#allocation2 + $0x8] sm:$0xff]
          %v778 = vld [vmem:[#allocation2 + $0x10] sm:$0xff]
          %v779 = vld [vmem:[#allocation2 + $0x18] sm:$0xff]
          %v780 = vld [vmem:[#allocation2 + $0x20] sm:$0xff]
          %v781 = vld [vmem:[#allocation2 + $0x28] sm:$0xff]
          %v782 = vld [vmem:[#allocation2 + $0x30] sm:$0xff]
          %v783 = vld [vmem:[#allocation2 + $0x38] sm:$0xff]
          %v784 = vld [vmem:[#allocation2 + $0x40] sm:$0xff]
          %v785 = vld [vmem:[#allocation2 + $0x48] sm:$0xff]
          %v786 = vld [vmem:[#allocation2 + $0x50] sm:$0xff]
          %v787 = vld [vmem:[#allocation2 + $0x58] sm:$0xff]
          %v788 = vld [vmem:[#allocation2 + $0x60] sm:$0xff]
          %v789 = vld [vmem:[#allocation2 + $0x68] sm:$0xff]
          %v790 = vld [vmem:[#allocation2 + $0x70] sm:$0xff]
          %v791 = vld [vmem:[#allocation2 + $0x78] sm:$0xff]
          %v792 = vld [vmem:[#allocation2 + $0x80] sm:$0xff]
          %v793 = vld [vmem:[#allocation2 + $0x88] sm:$0xff]
          %v794 = vld [vmem:[#allocation2 + $0x90] sm:$0xff]
          %v795 = vld [vmem:[#allocation2 + $0x98] sm:$0xff]
          %v796 = vld [vmem:[#allocation2 + $0xa0] sm:$0xff]
          %v797 = vld [vmem:[#allocation2 + $0xa8] sm:$0xff]
          %v798 = vld [vmem:[#allocation2 + $0xb0] sm:$0xff]
          %v799 = vld [vmem:[#allocation2 + $0xb8] sm:$0xff]
          %v800 = vld [vmem:[#allocation2 + $0xc0] sm:$0xff]
          %v801 = vld [vmem:[#allocation2 + $0xc8] sm:$0xff]
          %v802 = vld [vmem:[#allocation2 + $0xd0] sm:$0xff]
          %v803 = vld [vmem:[#allocation2 + $0xd8] sm:$0xff]
          %v804 = vld [vmem:[#allocation2 + $0xe0] sm:$0xff]
          %v805 = vld [vmem:[#allocation2 + $0xe8] sm:$0xff]
          %v806 = vld [vmem:[#allocation2 + $0xf0] sm:$0xff]
          %v807 = vld [vmem:[#allocation2 + $0xf8] sm:$0xff]
          %v808 = vld [vmem:[#allocation2 + $0x100] sm:$0x1]
          %v809 = vld [vmem:[#allocation2 + $0x108] sm:$0x1]
          %v810 = vadd.s32 %v349, 128
          %vm811 = vcmp.eq.s32.totalorder %v349, 128
          %vm812 = vcmp.eq.s32.totalorder %v350, 128
          %vm813 = vcmp.eq.s32.totalorder %v351, 128
          %vm814 = vcmp.eq.s32.totalorder %v352, 128
          %vm815 = vcmp.eq.s32.totalorder %v353, 128
          %vm816 = vcmp.eq.s32.totalorder %v354, 128
          %vm817 = vcmp.eq.s32.totalorder %v355, 128
          %vm818 = vcmp.eq.s32.totalorder %v356, 128
          %vm819 = vcmp.eq.s32.totalorder %v357, 128
          %vm820 = vcmp.eq.s32.totalorder %v358, 128
          %vm821 = vcmp.eq.s32.totalorder %v359, 128
          %vm822 = vcmp.eq.s32.totalorder %v360, 128
          %vm823 = vcmp.eq.s32.totalorder %v361, 128
          %vm824 = vcmp.eq.s32.totalorder %v362, 128
          %vm825 = vcmp.eq.s32.totalorder %v363, 128
          %vm826 = vcmp.eq.s32.totalorder %v364, 128
          %vm827 = vcmp.eq.s32.totalorder %v810, 128
          %v828 = vsel %vm811, 1, 0
          %v829 = vsel %vm812, 1, 0
          %v830 = vsel %vm813, 1, 0
          %v831 = vsel %vm814, 1, 0
          %v832 = vsel %vm815, 1, 0
          %v833 = vsel %vm816, 1, 0
          %v834 = vsel %vm817, 1, 0
          %v835 = vsel %vm818, 1, 0
          %v836 = vsel %vm819, 1, 0
          %v837 = vsel %vm820, 1, 0
          %v838 = vsel %vm821, 1, 0
          %v839 = vsel %vm822, 1, 0
          %v840 = vsel %vm823, 1, 0
          %v841 = vsel %vm824, 1, 0
          %v842 = vsel %vm825, 1, 0
          %v843 = vsel %vm826, 1, 0
          %v844 = vsel %vm827, 1, 0
          %v845 = vcvt.s32.f32 %v828
          %v846 = vcvt.s32.f32 %v829
          %v847 = vcvt.s32.f32 %v830
          %v848 = vcvt.s32.f32 %v831
          %v849 = vcvt.s32.f32 %v832
          %v850 = vcvt.s32.f32 %v833
          %v851 = vcvt.s32.f32 %v834
          %v852 = vcvt.s32.f32 %v835
          %v853 = vcvt.s32.f32 %v836
          %v854 = vcvt.s32.f32 %v837
          %v855 = vcvt.s32.f32 %v838
          %v856 = vcvt.s32.f32 %v839
          %v857 = vcvt.s32.f32 %v840
          %v858 = vcvt.s32.f32 %v841
          %v859 = vcvt.s32.f32 %v842
          %v860 = vcvt.s32.f32 %v843
          %v861 = vcvt.s32.f32 %v844
          %v862 = vsub.f32 1.0, %v845
          %v863 = vsub.f32 1.0, %v846
          %v864 = vsub.f32 1.0, %v847
          %v865 = vsub.f32 1.0, %v848
          %v866 = vsub.f32 1.0, %v849
          %v867 = vsub.f32 1.0, %v850
          %v868 = vsub.f32 1.0, %v851
          %v869 = vsub.f32 1.0, %v852
          %v870 = vsub.f32 1.0, %v853
          %v871 = vsub.f32 1.0, %v854
          %v872 = vsub.f32 1.0, %v855
          %v873 = vsub.f32 1.0, %v856
          %v874 = vsub.f32 1.0, %v857
          %v875 = vsub.f32 1.0, %v858
          %v876 = vsub.f32 1.0, %v859
          %v877 = vsub.f32 1.0, %v860
          %v878 = vsub.f32 1.0, %v861
          %v879 = vmul.f32 %v776, %v777
          %v880 = vmul.f32 %v778, %v779
          %v881 = vmul.f32 %v780, %v781
          %v882 = vmul.f32 %v782, %v783
          %v883 = vmul.f32 %v784, %v785
          %v884 = vmul.f32 %v786, %v787
          %v885 = vmul.f32 %v788, %v789
          %v886 = vmul.f32 %v790, %v791
          %v887 = vmul.f32 %v792, %v793
          %v888 = vmul.f32 %v794, %v795
          %v889 = vmul.f32 %v796, %v797
          %v890 = vmul.f32 %v798, %v799
          %v891 = vmul.f32 %v800, %v801
          %v892 = vmul.f32 %v802, %v803
          %v893 = vmul.f32 %v804, %v805
          %v894 = vmul.f32 %v806, %v807
          %v895 = vmul.f32 %v808, %v809
          %v896 = vmul.f32 %v879, %v862
          %v897 = vmul.f32 %v880, %v863
          %v898 = vmul.f32 %v881, %v864
          %v899 = vmul.f32 %v882, %v865
          %v900 = vmul.f32 %v883, %v866
          %v901 = vmul.f32 %v884, %v867
          %v902 = vmul.f32 %v885, %v868
          %v903 = vmul.f32 %v886, %v869
          %v904 = vmul.f32 %v887, %v870
          %v905 = vmul.f32 %v888, %v871
          %v906 = vmul.f32 %v889, %v872
          %v907 = vmul.f32 %v890, %v873
          %v908 = vmul.f32 %v891, %v874
          %v909 = vmul.f32 %v892, %v875
          %v910 = vmul.f32 %v893, %v876
          %v911 = vmul.f32 %v894, %v877
          %v912 = vmul.f32 %v895, %v878
          %v913 = vadd.f32 %v776, %v777
          %v914 = vadd.f32 %v778, %v779
          %v915 = vadd.f32 %v780, %v781
          %v916 = vadd.f32 %v782, %v783
          %v917 = vadd.f32 %v784, %v785
          %v918 = vadd.f32 %v786, %v787
          %v919 = vadd.f32 %v788, %v789
          %v920 = vadd.f32 %v790, %v791
          %v921 = vadd.f32 %v792, %v793
          %v922 = vadd.f32 %v794, %v795
          %v923 = vadd.f32 %v796, %v797
          %v924 = vadd.f32 %v798, %v799
          %v925 = vadd.f32 %v800, %v801
          %v926 = vadd.f32 %v802, %v803
          %v927 = vadd.f32 %v804, %v805
          %v928 = vadd.f32 %v806, %v807
          %v929 = vadd.f32 %v808, %v809
          %v930 = vmul.f32 %v913, %v845
          %v931 = vmul.f32 %v914, %v846
          %v932 = vmul.f32 %v915, %v847
          %v933 = vmul.f32 %v916, %v848
          %v934 = vmul.f32 %v917, %v849
          %v935 = vmul.f32 %v918, %v850
          %v936 = vmul.f32 %v919, %v851
          %v937 = vmul.f32 %v920, %v852
          %v938 = vmul.f32 %v921, %v853
          %v939 = vmul.f32 %v922, %v854
          %v940 = vmul.f32 %v923, %v855
          %v941 = vmul.f32 %v924, %v856
          %v942 = vmul.f32 %v925, %v857
          %v943 = vmul.f32 %v926, %v858
          %v944 = vmul.f32 %v927, %v859
          %v945 = vmul.f32 %v928, %v860
          %v946 = vmul.f32 %v929, %v861
          %v947 = vadd.f32 %v896, %v930
          %v948 = vadd.f32 %v897, %v931
          %v949 = vadd.f32 %v898, %v932
          %v950 = vadd.f32 %v899, %v933
          %v951 = vadd.f32 %v900, %v934
          %v952 = vadd.f32 %v901, %v935
          %v953 = vadd.f32 %v902, %v936
          %v954 = vadd.f32 %v903, %v937
          %v955 = vadd.f32 %v904, %v938
          %v956 = vadd.f32 %v905, %v939
          %v957 = vadd.f32 %v906, %v940
          %v958 = vadd.f32 %v907, %v941
          %v959 = vadd.f32 %v908, %v942
          %v960 = vadd.f32 %v909, %v943
          %v961 = vadd.f32 %v910, %v944
          %v962 = vadd.f32 %v911, %v945
          %v963 = vadd.f32 %v912, %v946
          %v964 = vadd.f32 %v947, %v948
          %v965 = vadd.f32 %v964, %v949
          %v966 = vadd.f32 %v965, %v950
          %v967 = vadd.f32 %v966, %v951
          %v968 = vadd.f32 %v967, %v952
          %v969 = vadd.f32 %v968, %v953
          %v970 = vadd.f32 %v969, %v954
          %v971 = vadd.f32 %v970, %v955
          %v972 = vadd.f32 %v971, %v956
          %v973 = vadd.f32 %v972, %v957
          %v974 = vadd.f32 %v973, %v958
          %v975 = vadd.f32 %v974, %v959
          %v976 = vadd.f32 %v975, %v960
          %v977 = vadd.f32 %v976, %v961
          %v978 = vadd.f32 %v977, %v962
          %vm979 = vcmask 1040384
          %v980 = vsel %vm979, %v963, 0.0
          %v981 = vadd.f32 %v978, %v980
          %v982 = vrot.slane %v981, 4
          %v983 = vadd.f32 %v981, %v982
          %v984 = vrot.slane %v983, 2
          %v985 = vadd.f32 %v983, %v984
          %v986 = vrot.slane %v985, 1
          %v987 = vadd.f32 %v985, %v986
          %988 = vst [vmem:[%s300] sm:$0x1] %v987
        $region78: #{graphsage_recommender_forward.3} parent=65 // pred_fallthru
          _
        %s989 = sand.u32 %s115, 1
        %s990 = scalar_lea.sflag [#allocation5], %s989
        %s991 = sand.u32 %s115, 1
        %s992 = scalar_lea.vmem [#allocation4], %s991
        // Predicated region
        $region79: #{graphsage_recommender_forward.3} parent=65 // pred_check
          %p993 = pneg %p125
        $region80: #{graphsage_recommender_forward.3} parent=65 // pred_check_branch
          %995 = sbr.rel (%p993) target = $region82
        $region81: #{graphsage_recommender_forward.3} parent=65 // pred_region
          %s997 = ssub.s32 16, 16
          %998 = vsyncadd %s990, %s997
          %s999 = smul.addr %s21, 16
          %s1000 = scalar_lea.hbm %s3, %s999
          %s1002 = sshll.u32 %s992, 4
          %s1003 = int_to_ptr.vmem [resolvable:$true] %s1002
          %1005 = dma.vmem_to_hbm [thread:$0]  %s1003, 16, %s1000, %s990
        $region82: #{graphsage_recommender_forward.3} parent=65 // pred_fallthru
          _
      $region66: #{graphsage_recommender_forward.3} parent=5 // pred_fallthru
        _
      %p1006 = scmp.le.s32.totalorder 2, %s12
      // Predicated region
      $region83: #{graphsage_recommender_forward.3} parent=5 // pred_check
        %p1007 = pneg %p1006
      $region84: #{graphsage_recommender_forward.3} parent=5 // pred_check_branch
        %1009 = sbr.rel (%p1007) target = $region86
      $region85: #{graphsage_recommender_forward.3} parent=5 // pred_region
        %s1010 = ssub.s32 %s12, 2
        // Predicated region
        $region87: #{graphsage_recommender_forward.3} parent=85 // pred_check
          %p1011 = pneg %p131
        $region88: #{graphsage_recommender_forward.3} parent=85 // pred_check_branch
          %1013 = sbr.rel (%p1011) target = $region90
        $region89: #{graphsage_recommender_forward.3} parent=85 // pred_region
          %s1014 = sand.u32 %s116, 1
          %s1015 = scalar_lea.sflag [#allocation5], %s1014
          %s1016 = sand.u32 %s116, 1
          %s1017 = scalar_lea.vmem [#allocation4], %s1016
          %1018 = dma.done %s1015, 16
        $region90: #{graphsage_recommender_forward.3} parent=85 // pred_fallthru
          _
      $region86: #{graphsage_recommender_forward.3} parent=5 // pred_fallthru
        _
    $region6: #{graphsage_recommender_forward.3} parent=1 // loop_footer
      %s16 = sadd.s32 1, %s12
    $region7: #{graphsage_recommender_forward.3} parent=1 // loop_footer_branch
      %11 = sbr.rel target = $region3
    $region8: #{graphsage_recommender_forward.3} parent=1 // loop_exit
      _
    %1019 = vsyncpa [#allocation5], 1
    %s1020 = scalar_lea.sflag [#allocation5], 1
    %1021 = vsyncpa %s1020, 1

</llo_original>
